<compile_context>
chip_gen: v6e
topology: v6e:2x2x1
jax: 0.10.0
libtpu: 0.0.40
codegen_flags: <defaults>
</compile_context>

<pallas_src>
import jax
import jax.numpy as jnp
from jax.experimental import pallas as pl
from jax.experimental.pallas import tpu as pltpu

NUM_CLASSES = 10
IN_FEATURES = 32 * 32   # 1024
OUT_PAD = 128           # classifier head padded to one full lane group
NEG_BIG = -1e30         # bias on padded classes -> exp(pad - max) == 0.0 exactly


def _sigmoid(x):
    # exp on the EUP, add + divide on the VPU; matches nn.Sigmoid in f32.
    return 1.0 / (1.0 + jnp.exp(-x))


def mlp3_kernel(x_ref, w1_ref, b1_ref, w2_ref, b2_ref, w3_ref, b3_ref, o_ref):
    mxu_dt = w1_ref.dtype                        # bf16 (default) or f32
    x = x_ref[...].astype(mxu_dt)                # [TB, 1024]

    # fc1 + dropout (identity in eval mode) + sigmoid
    h1 = jnp.dot(x, w1_ref[...], preferred_element_type=jnp.float32) + b1_ref[...]
    a1 = _sigmoid(h1)                            # [TB, W] f32

    # fc2 + dropout (identity in eval mode) + sigmoid
    h2 = jnp.dot(a1.astype(mxu_dt), w2_ref[...],
                 preferred_element_type=jnp.float32) + b2_ref[...]
    a2 = _sigmoid(h2)                            # [TB, W] f32

    # fc3 (head padded to 128 lanes; padded columns carry bias NEG_BIG)
    h3 = jnp.dot(a2.astype(mxu_dt), w3_ref[...],
                 preferred_element_type=jnp.float32) + b3_ref[...]

    # softmax over dim=1: padded columns sit at ~-1e30, so exp underflows to 0
    m = jnp.max(h3, axis=1, keepdims=True)
    e = jnp.exp(h3 - m)
    s = jnp.sum(e, axis=1, keepdims=True)
    o_ref[...] = e / s                           # exact divide keeps sum==1 at f32


def mlp3_hardsig_forward(x, params, *, weights_dtype=jnp.bfloat16, batch_tile=256):
    """x: any shape flattening to [-1, 1024] (e.g. [B, 1, 32, 32]).
    params: PyTorch nn.Linear layout — weight (out, in), bias (out,)."""
    xf = x.reshape(-1, IN_FEATURES).astype(jnp.float32)     # x.view(-1, 32*32)
    batch = xf.shape[0]
    width = params["w1"].shape[0]

    # Batch tile: multiple of 8 sublanes, capped by batch_tile; pad batch to a
    # multiple of the tile (padded rows are sliced off at the end).
    batch_tile = max(8, (batch_tile // 8) * 8)
    rounded = ((batch + 7) // 8) * 8
    tb = min(batch_tile, rounded)
    padded = ((batch + tb - 1) // tb) * tb
    if padded != batch:
        xf = jnp.pad(xf, ((0, padded - batch), (0, 0)))

    # Weights pre-transposed to [in, out] and cast to the MXU input dtype.
    wdt = jnp.dtype(weights_dtype)
    w1 = params["w1"].T.astype(wdt)                          # [1024, W]
    b1 = params["b1"].reshape(1, width).astype(jnp.float32)
    w2 = params["w2"].T.astype(wdt)                          # [W, W]
    b2 = params["b2"].reshape(1, width).astype(jnp.float32)
    w3 = jnp.zeros((width, OUT_PAD), wdt).at[:, :NUM_CLASSES].set(
        params["w3"].T.astype(wdt))                          # [W, 128]
    b3 = jnp.full((1, OUT_PAD), NEG_BIG, jnp.float32).at[:, :NUM_CLASSES].set(
        params["b3"].astype(jnp.float32))

    resident = lambda shape: pl.BlockSpec(shape, lambda i: (0, 0))

    flops = 2 * padded * (IN_FEATURES * width + width * width + width * OUT_PAD)
    transcendentals = padded * (2 * width + OUT_PAD)
    bytes_accessed = (
        (IN_FEATURES * width + width * width + width * OUT_PAD) * wdt.itemsize
        + (2 * width + OUT_PAD) * 4
        + padded * (IN_FEATURES + OUT_PAD) * 4)

    out = pl.pallas_call(
        mlp3_kernel,
        out_shape=jax.ShapeDtypeStruct((padded, OUT_PAD), jnp.float32),
        grid=(padded // tb,),
        in_specs=[
            pl.BlockSpec((tb, IN_FEATURES), lambda i: (i, 0)),   # x: tiled on batch
            resident((IN_FEATURES, width)),                      # w1
            resident((1, width)),                                # b1
            resident((width, width)),                            # w2
            resident((1, width)),                                # b2
            resident((width, OUT_PAD)),                          # w3 (padded)
            resident((1, OUT_PAD)),                              # b3 (padded)
        ],
        out_specs=pl.BlockSpec((tb, OUT_PAD), lambda i: (i, 0)),
        compiler_params=pltpu.CompilerParams(
            dimension_semantics=("parallel",),     # shard batch across TCs (v7x)
            vmem_limit_bytes=32 << 20,             # fits every generation's VMEM
        ),
        cost_estimate=pl.CostEstimate(
            flops=flops, transcendentals=transcendentals,
            bytes_accessed=bytes_accessed),
    )(xf, w1, b1, w2, b2, w3, b3)

    return out[:batch, :NUM_CLASSES]


def init_params(key, width=512):
    """Deterministic synthetic init; PyTorch nn.Linear shapes (out,in)/(out,)."""
    ks = jax.random.split(key, 6)

    def linear(kw, kb, fan_in, fan_out):
        bound = 1.0 / (fan_in ** 0.5)
        w = jax.random.uniform(kw, (fan_out, fan_in), jnp.float32, -bound, bound)
        b = jax.random.uniform(kb, (fan_out,), jnp.float32, -bound, bound)
        return w, b

    w1, b1 = linear(ks[0], ks[1], IN_FEATURES, width)
    w2, b2 = linear(ks[2], ks[3], width, width)
    w3, b3 = linear(ks[4], ks[5], width, NUM_CLASSES)
    return dict(w1=w1, b1=b1, w2=w2, b2=b2, w3=w3, b3=b3)


def reference_forward_f32(x, params):
    """Exact module semantics (eval-mode dropout = identity), pure f32."""
    xf = x.reshape(-1, IN_FEATURES).astype(jnp.float32)
    a1 = jax.nn.sigmoid(xf @ params["w1"].T + params["b1"])
    a2 = jax.nn.sigmoid(a1 @ params["w2"].T + params["b2"])
    logits = a2 @ params["w3"].T + params["b3"]
    return jax.nn.softmax(logits, axis=1)


def reference_forward_matched(x, params, weights_dtype=jnp.bfloat16):
    """Same numerics as the kernel: bf16 MXU inputs, f32 accumulate/elementwise."""
    xf = x.reshape(-1, IN_FEATURES).astype(jnp.float32)

    def dense(a, w, b):
        return jnp.dot(a.astype(weights_dtype), w.T.astype(weights_dtype),
                       preferred_element_type=jnp.float32) + b.astype(jnp.float32)

    a1 = 1.0 / (1.0 + jnp.exp(-dense(xf, params["w1"], params["b1"])))
    a2 = 1.0 / (1.0 + jnp.exp(-dense(a1, params["w2"], params["b2"])))
    logits = dense(a2, params["w3"], params["b3"])
    m = jnp.max(logits, axis=1, keepdims=True)
    e = jnp.exp(logits - m)
    return e / jnp.sum(e, axis=1, keepdims=True)


if __name__ == "__main__":
    # TODO(synk): dropout is implemented in eval mode (identity); training-mode
    # masking would need pltpu.prng_* in-kernel and is out of scope here.
    key = jax.random.PRNGKey(0)
    k_x, k_p = jax.random.split(key)

    batch, width = 20, 512
    x = jax.random.normal(k_x, (batch, 1, 32, 32), jnp.float32)   # NCHW-style input
    params = init_params(k_p, width=width)

    # Small batch tile so the example exercises the batch grid + padded tail;
    # production calls use the default batch_tile=256.
    out = mlp3_hardsig_forward(x, params, batch_tile=8)
    out = jax.block_until_ready(out)
    assert out.shape == (batch, NUM_CLASSES)

    # Kernel fidelity vs matched-numerics (bf16 MXU inputs, f32 accumulation).
    ref_matched = reference_forward_matched(x, params)
    assert jnp.allclose(out, ref_matched, atol=5e-4, rtol=1e-3), \
        float(jnp.max(jnp.abs(out - ref_matched)))

    # Module semantics vs pure-f32 reference (tolerance relaxed for bf16 weights).
    ref_f32 = reference_forward_f32(x, params)
    assert jnp.allclose(out, ref_f32, atol=5e-3, rtol=5e-2), \
        float(jnp.max(jnp.abs(out - ref_f32)))

    # Softmax rows still sum to one.
    assert jnp.allclose(jnp.sum(out, axis=1), jnp.ones((batch,)), atol=1e-5)

    print("KERNEL_OK")
</pallas_src>

<mosaic_0001>
module attributes {stable_mosaic.version = 11 : i64} {
  func.func @mlp3_kernel(%arg0: i32, %arg1: memref<8x1024xf32, #tpu.memory_space<vmem>>, %arg2: memref<1024x512xbf16, #tpu.memory_space<vmem>>, %arg3: memref<1x512xf32, #tpu.memory_space<vmem>>, %arg4: memref<512x512xbf16, #tpu.memory_space<vmem>>, %arg5: memref<1x512xf32, #tpu.memory_space<vmem>>, %arg6: memref<512x128xbf16, #tpu.memory_space<vmem>>, %arg7: memref<1x128xf32, #tpu.memory_space<vmem>>, %arg8: memref<8x128xf32, #tpu.memory_space<vmem>>) attributes {dimension_semantics = [#tpu.dimension_semantics<parallel>], iteration_bounds = array<i64: 3>, scalar_prefetch = 0 : i64, scratch_operands = 0 : i64, tpu.core_type = #tpu.core_type<tc>, window_params = [{transform_indices = @transform_0, window_bounds = array<i64: 8, 1024>}, {pipeline_mode = #tpu.pipeline_mode<synchronous>, transform_indices = @transform_1, window_bounds = array<i64: 1024, 512>}, {pipeline_mode = #tpu.pipeline_mode<synchronous>, transform_indices = @transform_2, window_bounds = array<i64: 1, 512>}, {pipeline_mode = #tpu.pipeline_mode<synchronous>, transform_indices = @transform_3, window_bounds = array<i64: 512, 512>}, {pipeline_mode = #tpu.pipeline_mode<synchronous>, transform_indices = @transform_4, window_bounds = array<i64: 1, 512>}, {pipeline_mode = #tpu.pipeline_mode<synchronous>, transform_indices = @transform_5, window_bounds = array<i64: 512, 128>}, {pipeline_mode = #tpu.pipeline_mode<synchronous>, transform_indices = @transform_6, window_bounds = array<i64: 1, 128>}, {transform_indices = @transform_7, window_bounds = array<i64: 8, 128>}]} {
    %c0 = arith.constant 0 : index
    %c0_0 = arith.constant 0 : index
    %0 = vector.load %arg1[%c0, %c0_0] : memref<8x1024xf32, #tpu.memory_space<vmem>>, vector<8x1024xf32>
    %1 = arith.truncf %0 : vector<8x1024xf32> to vector<8x1024xbf16>
    %c0_1 = arith.constant 0 : index
    %c0_2 = arith.constant 0 : index
    %2 = vector.load %arg2[%c0_1, %c0_2] : memref<1024x512xbf16, #tpu.memory_space<vmem>>, vector<1024x512xbf16>
    %cst = arith.constant dense<0.000000e+00> : vector<8x512xf32>
    %3 = tpu.matmul %1, %2, %cst {dimension_numbers = #tpu.dot_dimension_numbers<[1], [0], [0], [1], [0, 0, 1, 1], [], []>} : vector<8x1024xbf16>, vector<1024x512xbf16>, vector<8x512xf32> -> vector<8x512xf32>
    %c0_3 = arith.constant 0 : index
    %c0_4 = arith.constant 0 : index
    %4 = vector.load %arg3[%c0_3, %c0_4] : memref<1x512xf32, #tpu.memory_space<vmem>>, vector<1x512xf32>
    %5 = vector.broadcast %4 : vector<1x512xf32> to vector<8x512xf32>
    %6 = arith.addf %3, %5 : vector<8x512xf32>
    %cst_5 = arith.constant 0.000000e+00 : f32
    %7 = vector.broadcast %cst_5 : f32 to vector<8x512xf32>
    %8 = arith.subf %7, %6 : vector<8x512xf32>
    %9 = math.exp %8 : vector<8x512xf32>
    %cst_6 = arith.constant 1.000000e+00 : f32
    %10 = vector.broadcast %cst_6 : f32 to vector<8x512xf32>
    %11 = arith.addf %10, %9 : vector<8x512xf32>
    %cst_7 = arith.constant 1.000000e+00 : f32
    %12 = vector.broadcast %cst_7 : f32 to vector<8x512xf32>
    %13 = arith.divf %12, %11 : vector<8x512xf32>
    %14 = arith.truncf %13 : vector<8x512xf32> to vector<8x512xbf16>
    %c0_8 = arith.constant 0 : index
    %c0_9 = arith.constant 0 : index
    %15 = vector.load %arg4[%c0_8, %c0_9] : memref<512x512xbf16, #tpu.memory_space<vmem>>, vector<512x512xbf16>
    %cst_10 = arith.constant dense<0.000000e+00> : vector<8x512xf32>
    %16 = tpu.matmul %14, %15, %cst_10 {dimension_numbers = #tpu.dot_dimension_numbers<[1], [0], [0], [1], [0, 0, 1, 1], [], []>} : vector<8x512xbf16>, vector<512x512xbf16>, vector<8x512xf32> -> vector<8x512xf32>
    %c0_11 = arith.constant 0 : index
    %c0_12 = arith.constant 0 : index
    %17 = vector.load %arg5[%c0_11, %c0_12] : memref<1x512xf32, #tpu.memory_space<vmem>>, vector<1x512xf32>
    %18 = vector.broadcast %17 : vector<1x512xf32> to vector<8x512xf32>
    %19 = arith.addf %16, %18 : vector<8x512xf32>
    %cst_13 = arith.constant 0.000000e+00 : f32
    %20 = vector.broadcast %cst_13 : f32 to vector<8x512xf32>
    %21 = arith.subf %20, %19 : vector<8x512xf32>
    %22 = math.exp %21 : vector<8x512xf32>
    %cst_14 = arith.constant 1.000000e+00 : f32
    %23 = vector.broadcast %cst_14 : f32 to vector<8x512xf32>
    %24 = arith.addf %23, %22 : vector<8x512xf32>
    %cst_15 = arith.constant 1.000000e+00 : f32
    %25 = vector.broadcast %cst_15 : f32 to vector<8x512xf32>
    %26 = arith.divf %25, %24 : vector<8x512xf32>
    %27 = arith.truncf %26 : vector<8x512xf32> to vector<8x512xbf16>
    %c0_16 = arith.constant 0 : index
    %c0_17 = arith.constant 0 : index
    %28 = vector.load %arg6[%c0_16, %c0_17] : memref<512x128xbf16, #tpu.memory_space<vmem>>, vector<512x128xbf16>
    %cst_18 = arith.constant dense<0.000000e+00> : vector<8x128xf32>
    %29 = tpu.matmul %27, %28, %cst_18 {dimension_numbers = #tpu.dot_dimension_numbers<[1], [0], [0], [1], [0, 0, 1, 1], [], []>} : vector<8x512xbf16>, vector<512x128xbf16>, vector<8x128xf32> -> vector<8x128xf32>
    %c0_19 = arith.constant 0 : index
    %c0_20 = arith.constant 0 : index
    %30 = vector.load %arg7[%c0_19, %c0_20] : memref<1x128xf32, #tpu.memory_space<vmem>>, vector<1x128xf32>
    %31 = vector.broadcast %30 : vector<1x128xf32> to vector<8x128xf32>
    %32 = arith.addf %29, %31 : vector<8x128xf32>
    %cst_21 = arith.constant dense<0xFF800000> : vector<8xf32>
    %33 = vector.multi_reduction <maximumf>, %32, %cst_21 [1] : vector<8x128xf32> to vector<8xf32>
    %34 = vector.shape_cast %33 : vector<8xf32> to vector<8x1xf32>
    %35 = vector.broadcast %34 : vector<8x1xf32> to vector<8x128xf32>
    %36 = arith.subf %32, %35 : vector<8x128xf32>
    %37 = math.exp %36 : vector<8x128xf32>
    %cst_22 = arith.constant dense<0.000000e+00> : vector<8xf32>
    %38 = vector.multi_reduction <add>, %37, %cst_22 [1] : vector<8x128xf32> to vector<8xf32>
    %39 = vector.shape_cast %38 : vector<8xf32> to vector<8x1xf32>
    %40 = vector.broadcast %39 : vector<8x1xf32> to vector<8x128xf32>
    %41 = arith.divf %37, %40 : vector<8x128xf32>
    %c0_23 = arith.constant 0 : index
    %c0_24 = arith.constant 0 : index
    %42 = vector.load %arg8[%c0_23, %c0_24] : memref<8x128xf32, #tpu.memory_space<vmem>>, vector<8x128xf32>
    tpu.vector_store %arg8[%c0_23, %c0_24], %41 {strides = array<i32>} : memref<8x128xf32, #tpu.memory_space<vmem>>, vector<8x128xf32>,
    return
  }
  func.func @transform_0(%arg0: i32) -> (i32, i32) {
    %c0_i32 = arith.constant 0 : i32
    %c0_i32_0 = arith.constant 0 : i32
    return %arg0, %c0_i32 : i32, i32
  }
  func.func @transform_1(%arg0: i32) -> (i32, i32) {
    %c0_i32 = arith.constant 0 : i32
    %c0_i32_0 = arith.constant 0 : i32
    %c0_i32_1 = arith.constant 0 : i32
    return %c0_i32, %c0_i32_0 : i32, i32
  }
  func.func @transform_2(%arg0: i32) -> (i32, i32) {
    %c0_i32 = arith.constant 0 : i32
    %c0_i32_0 = arith.constant 0 : i32
    %c0_i32_1 = arith.constant 0 : i32
    return %c0_i32, %c0_i32_0 : i32, i32
  }
  func.func @transform_3(%arg0: i32) -> (i32, i32) {
    %c0_i32 = arith.constant 0 : i32
    %c0_i32_0 = arith.constant 0 : i32
    %c0_i32_1 = arith.constant 0 : i32
    return %c0_i32, %c0_i32_0 : i32, i32
  }
  func.func @transform_4(%arg0: i32) -> (i32, i32) {
    %c0_i32 = arith.constant 0 : i32
    %c0_i32_0 = arith.constant 0 : i32
    %c0_i32_1 = arith.constant 0 : i32
    return %c0_i32, %c0_i32_0 : i32, i32
  }
  func.func @transform_5(%arg0: i32) -> (i32, i32) {
    %c0_i32 = arith.constant 0 : i32
    %c0_i32_0 = arith.constant 0 : i32
    %c0_i32_1 = arith.constant 0 : i32
    return %c0_i32, %c0_i32_0 : i32, i32
  }
  func.func @transform_6(%arg0: i32) -> (i32, i32) {
    %c0_i32 = arith.constant 0 : i32
    %c0_i32_0 = arith.constant 0 : i32
    %c0_i32_1 = arith.constant 0 : i32
    return %c0_i32, %c0_i32_0 : i32, i32
  }
  func.func @transform_7(%arg0: i32) -> (i32, i32) {
    %c0_i32 = arith.constant 0 : i32
    %c0_i32_0 = arith.constant 0 : i32
    return %arg0, %c0_i32 : i32, i32
  }
}

</mosaic_0001>

<llo_original>
// kernel: tpu_custom_call.1
$region0: #{tpu_custom_call.1}
  #allocation0 [shape = 'u32[]', space=smem, size = 0x4, offset = 0x4, fixed_abs, tag = 'smem constant byte address 0x4 - core index']
  #allocation1 [shape = 'u32[144,128]{1,0:T(1,128)}', space=vmem, size = 0x12000, scoped, tag = 'internal scratch']
  %s0 = inlined_call_operand.hbm [shape: f32[24,1024], index: 0, kind: input, shape index: {}]
  %s1 = inlined_call_operand.hbm [shape: bf16[1024,512], index: 1, kind: input, shape index: {}]
  %s2 = inlined_call_operand.hbm [shape: f32[1,512], index: 2, kind: input, shape index: {}]
  %s3 = inlined_call_operand.hbm [shape: bf16[512,512], index: 3, kind: input, shape index: {}]
  %s4 = inlined_call_operand.vmem [shape: f32[1,512], index: 4, kind: input, shape index: {}]
  %s5 = inlined_call_operand.hbm [shape: bf16[512,128], index: 5, kind: input, shape index: {}]
  %s6 = inlined_call_operand.vmem [shape: f32[1,128], index: 6, kind: input, shape index: {}]
  %s7 = inlined_call_operand.hbm [shape: f32[24,128], index: 7, kind: output, shape index: {}]
  %s8 = sld [smem:[#allocation0]]
  $region81: #{tpu_custom_call.1} parent=0
    _
  %s10 = ssub.s32 1, %s8
  %s11 = scalar_select 0, %s10, %s8
  $region1: #{tpu_custom_call.1} parent=0
    #allocation2 [shape = 'u8[65536]{0}', space=vmem, size = 0x10000, scoped, tag = 'input window, operand 0']
    #allocation3 [shape = 's32[2]{0}', space=sflag, size = 0x8, scoped, tag = 'scoped memory for tpu_custom_call.1']
    #allocation4 [shape = 's32[2]{0}', space=sflag, size = 0x8, scoped, tag = 'scoped memory for tpu_custom_call.1']
    #allocation5 [shape = 'u8[1048576]{0}', space=vmem, size = 0x100000, scoped, tag = 'input window, operand 1, single buffered']
    #allocation6 [shape = 's32[1]{0}', space=sflag, size = 0x4, scoped, tag = 'scoped memory for tpu_custom_call.1']
    #allocation7 [shape = 'u8[2048]{0}', space=vmem, size = 0x800, scoped, tag = 'input window, operand 2, single buffered']
    #allocation8 [shape = 'u8[524288]{0}', space=vmem, size = 0x80000, scoped, tag = 'input window, operand 3, single buffered']
    #allocation9 [shape = 's32[1]{0}', space=sflag, size = 0x4, scoped, tag = 'scoped memory for tpu_custom_call.1']
    #allocation10 [shape = 'u8[131072]{0}', space=vmem, size = 0x20000, scoped, tag = 'input window, operand 5, single buffered']
    #allocation11 [shape = 'u8[8192]{0}', space=vmem, size = 0x2000, scoped, tag = 'output window, operand 0']
    %12 = vsyncpa [#allocation3], 0
    %s13 = scalar_lea.sflag [#allocation3], 1
    %14 = vsyncpa %s13, 0
    %15 = vsyncpa [#allocation6], 0
    %16 = vsyncpa [#allocation9], 0
    %17 = vsyncpa [#allocation4], 0
    %s18 = scalar_lea.sflag [#allocation4], 1
    %19 = vsyncpa %s18, 0
    loop: start=0, step=1, limit=5
    $region2: #{tpu_custom_call.1} parent=1 // loop_pre_header
      _
    $region3: #{tpu_custom_call.1} parent=1 // loop_header
      %s21 = sphi 0, %s25
      %p22 = scmp.ge.s32.totalorder %s21, 5
      %s31 = sphi 0, %s33
      %s34 = sphi 0, %s31
      %s35 = sphi 0, %s34
      %s51 = sphi 0, %s35
      %s55 = sphi 0, %s55
      %s57 = sphi 0, %s55
      %s58 = sphi 0, %s57
      %s72 = sphi 0, %s58
      %s76 = sphi 0, %s76
      %s78 = sphi 0, %s76
      %s79 = sphi 0, %s78
      %s93 = sphi 0, %s79
      %s97 = sphi 0, %s97
      %s99 = sphi 0, %s97
      %s100 = sphi 0, %s99
      %s114 = sphi 0, %s100
      %s118 = sphi 0, %s118
      %s120 = sphi 0, %s118
      %s121 = sphi 0, %s120
      %s135 = sphi 0, %s121
      %s139 = sphi 0, %s139
      %s141 = sphi 0, %s139
      %s142 = sphi 0, %s141
      %s156 = sphi 0, %s142
      %s160 = sphi 0, %s160
      %s162 = sphi 0, %s160
      %s163 = sphi 0, %s162
      %s177 = sphi 0, %s163
      %s183 = sphi 0, %s185
      %s186 = sphi 0, %s183
      %s187 = sphi 0, %s186
      %s203 = sphi 0, %s187
    $region4: #{tpu_custom_call.1} parent=1 // loop_header_branch
      %24 = sbr.rel (%p22) target = $region8
    $region5: #{tpu_custom_call.1} parent=1 // loop_body
      %s26 = ssub.s32 %s21, 1
      %s27 = ssub.s32 %s21, 2
      %s28 = sadd.s32 %s21, 1
      %s29 = ssub.s32 %s21, %s28
      %p30 = scmp.eq.s32.totalorder %s29, 0
      %s32 = sadd.s32 %s31, 1
      %s33 = scalar_select %p30, %s31, %s32
      %p36 = pneg %p30
      %p37 = scmp.eq.s32.totalorder %s21, 2
      %p38 = por %p36, %p37
      %p39 = scmp.ne.s32.totalorder %s31, %s34
      %p40 = scmp.eq.s32.totalorder %s21, 0
      %p41 = por %p39, %p40
      %p42 = scmp.ne.s32.totalorder %s31, %s34
      %p43 = scmp.eq.s32.totalorder %s26, 2
      %p44 = por %p42, %p43
      %p45 = scmp.ne.s32.totalorder %s34, %s35
      %p46 = scmp.eq.s32.totalorder %s26, 0
      %p47 = por %p45, %p46
      %p48 = scmp.ne.s32.totalorder %s34, %s35
      %p49 = scmp.eq.s32.totalorder %s27, 2
      %p50 = por %p48, %p49
      %p52 = scmp.ne.s32.totalorder %s35, %s51
      %p53 = scmp.eq.s32.totalorder %s27, 0
      %p54 = por %p52, %p53
      %s56 = sadd.s32 %s55, 1
      %p59 = scmp.eq.s32.totalorder %s21, 2
      %p60 = scmp.ne.s32.totalorder %s55, %s57
      %p61 = scmp.eq.s32.totalorder %s21, 0
      %p62 = por %p60, %p61
      %p63 = scmp.ne.s32.totalorder %s55, %s57
      %p64 = scmp.eq.s32.totalorder %s26, 2
      %p65 = por %p63, %p64
      %p66 = scmp.ne.s32.totalorder %s57, %s58
      %p67 = scmp.eq.s32.totalorder %s26, 0
      %p68 = por %p66, %p67
      %p69 = scmp.ne.s32.totalorder %s57, %s58
      %p70 = scmp.eq.s32.totalorder %s27, 2
      %p71 = por %p69, %p70
      %p73 = scmp.ne.s32.totalorder %s58, %s72
      %p74 = scmp.eq.s32.totalorder %s27, 0
      %p75 = por %p73, %p74
      %s77 = sadd.s32 %s76, 1
      %p80 = scmp.eq.s32.totalorder %s21, 2
      %p81 = scmp.ne.s32.totalorder %s76, %s78
      %p82 = scmp.eq.s32.totalorder %s21, 0
      %p83 = por %p81, %p82
      %p84 = scmp.ne.s32.totalorder %s76, %s78
      %p85 = scmp.eq.s32.totalorder %s26, 2
      %p86 = por %p84, %p85
      %p87 = scmp.ne.s32.totalorder %s78, %s79
      %p88 = scmp.eq.s32.totalorder %s26, 0
      %p89 = por %p87, %p88
      %p90 = scmp.ne.s32.totalorder %s78, %s79
      %p91 = scmp.eq.s32.totalorder %s27, 2
      %p92 = por %p90, %p91
      %p94 = scmp.ne.s32.totalorder %s79, %s93
      %p95 = scmp.eq.s32.totalorder %s27, 0
      %p96 = por %p94, %p95
      %s98 = sadd.s32 %s97, 1
      %p101 = scmp.eq.s32.totalorder %s21, 2
      %p102 = scmp.ne.s32.totalorder %s97, %s99
      %p103 = scmp.eq.s32.totalorder %s21, 0
      %p104 = por %p102, %p103
      %p105 = scmp.ne.s32.totalorder %s97, %s99
      %p106 = scmp.eq.s32.totalorder %s26, 2
      %p107 = por %p105, %p106
      %p108 = scmp.ne.s32.totalorder %s99, %s100
      %p109 = scmp.eq.s32.totalorder %s26, 0
      %p110 = por %p108, %p109
      %p111 = scmp.ne.s32.totalorder %s99, %s100
      %p112 = scmp.eq.s32.totalorder %s27, 2
      %p113 = por %p111, %p112
      %p115 = scmp.ne.s32.totalorder %s100, %s114
      %p116 = scmp.eq.s32.totalorder %s27, 0
      %p117 = por %p115, %p116
      %s119 = sadd.s32 %s118, 1
      %p122 = scmp.eq.s32.totalorder %s21, 2
      %p123 = scmp.ne.s32.totalorder %s118, %s120
      %p124 = scmp.eq.s32.totalorder %s21, 0
      %p125 = por %p123, %p124
      %p126 = scmp.ne.s32.totalorder %s118, %s120
      %p127 = scmp.eq.s32.totalorder %s26, 2
      %p128 = por %p126, %p127
      %p129 = scmp.ne.s32.totalorder %s120, %s121
      %p130 = scmp.eq.s32.totalorder %s26, 0
      %p131 = por %p129, %p130
      %p132 = scmp.ne.s32.totalorder %s120, %s121
      %p133 = scmp.eq.s32.totalorder %s27, 2
      %p134 = por %p132, %p133
      %p136 = scmp.ne.s32.totalorder %s121, %s135
      %p137 = scmp.eq.s32.totalorder %s27, 0
      %p138 = por %p136, %p137
      %s140 = sadd.s32 %s139, 1
      %p143 = scmp.eq.s32.totalorder %s21, 2
      %p144 = scmp.ne.s32.totalorder %s139, %s141
      %p145 = scmp.eq.s32.totalorder %s21, 0
      %p146 = por %p144, %p145
      %p147 = scmp.ne.s32.totalorder %s139, %s141
      %p148 = scmp.eq.s32.totalorder %s26, 2
      %p149 = por %p147, %p148
      %p150 = scmp.ne.s32.totalorder %s141, %s142
      %p151 = scmp.eq.s32.totalorder %s26, 0
      %p152 = por %p150, %p151
      %p153 = scmp.ne.s32.totalorder %s141, %s142
      %p154 = scmp.eq.s32.totalorder %s27, 2
      %p155 = por %p153, %p154
      %p157 = scmp.ne.s32.totalorder %s142, %s156
      %p158 = scmp.eq.s32.totalorder %s27, 0
      %p159 = por %p157, %p158
      %s161 = sadd.s32 %s160, 1
      %p164 = scmp.eq.s32.totalorder %s21, 2
      %p165 = scmp.ne.s32.totalorder %s160, %s162
      %p166 = scmp.eq.s32.totalorder %s21, 0
      %p167 = por %p165, %p166
      %p168 = scmp.ne.s32.totalorder %s160, %s162
      %p169 = scmp.eq.s32.totalorder %s26, 2
      %p170 = por %p168, %p169
      %p171 = scmp.ne.s32.totalorder %s162, %s163
      %p172 = scmp.eq.s32.totalorder %s26, 0
      %p173 = por %p171, %p172
      %p174 = scmp.ne.s32.totalorder %s162, %s163
      %p175 = scmp.eq.s32.totalorder %s27, 2
      %p176 = por %p174, %p175
      %p178 = scmp.ne.s32.totalorder %s163, %s177
      %p179 = scmp.eq.s32.totalorder %s27, 0
      %p180 = por %p178, %p179
      %s181 = ssub.s32 %s21, %s28
      %p182 = scmp.eq.s32.totalorder %s181, 0
      %s184 = sadd.s32 %s183, 1
      %s185 = scalar_select %p182, %s183, %s184
      %p188 = pneg %p182
      %p189 = scmp.eq.s32.totalorder %s21, 2
      %p190 = por %p188, %p189
      %p191 = scmp.ne.s32.totalorder %s183, %s186
      %p192 = scmp.eq.s32.totalorder %s21, 0
      %p193 = por %p191, %p192
      %p194 = scmp.ne.s32.totalorder %s183, %s186
      %p195 = scmp.eq.s32.totalorder %s26, 2
      %p196 = por %p194, %p195
      %p197 = scmp.ne.s32.totalorder %s186, %s187
      %p198 = scmp.eq.s32.totalorder %s26, 0
      %p199 = por %p197, %p198
      %p200 = scmp.ne.s32.totalorder %s186, %s187
      %p201 = scmp.eq.s32.totalorder %s27, 2
      %p202 = por %p200, %p201
      %p204 = scmp.ne.s32.totalorder %s187, %s203
      %p205 = scmp.eq.s32.totalorder %s27, 0
      %p206 = por %p204, %p205
      %p207 = scmp.le.s32.totalorder 1, %s21
      %p208 = scmp.lt.s32.totalorder %s21, 4
      %p209 = pnand %p207, %p208
      %p210 = pneg %p209
      // Predicated region
      $region9: #{tpu_custom_call.1} parent=5 // pred_check
        _
      $region10: #{tpu_custom_call.1} parent=5 // pred_check_branch
        %212 = sbr.rel (%p209) target = $region12
      $region11: #{tpu_custom_call.1} parent=5 // pred_region
        %s213 = ssub.s32 %s21, 1
        // Predicated region
        $region13: #{tpu_custom_call.1} parent=11 // pred_check
          %p214 = pneg %p68
        $region14: #{tpu_custom_call.1} parent=11 // pred_check_branch
          %216 = sbr.rel (%p214) target = $region16
        $region15: #{tpu_custom_call.1} parent=11 // pred_region
          %s218 = ssub.s32 32768, 32768
          %219 = vsyncadd [#allocation6], %s218
          %s220 = sshll.u32 [#allocation5], 4
          %s221 = int_to_ptr.vmem [resolvable:$true] %s220
          %226 = dma.hbm_to_vmem [thread:$0]  %s1, 32768, %s221, [#allocation6], 256, 256, 16
        $region16: #{tpu_custom_call.1} parent=11 // pred_fallthru
          _
        // Predicated region
        $region17: #{tpu_custom_call.1} parent=11 // pred_check
          %p227 = pneg %p89
        $region18: #{tpu_custom_call.1} parent=11 // pred_check_branch
          %229 = sbr.rel (%p227) target = $region20
        $region19: #{tpu_custom_call.1} parent=11 // pred_region
          %s231 = ssub.s32 64, 64
          %232 = vsyncadd [#allocation6], %s231
          %s234 = sshll.u32 [#allocation7], 4
          %s235 = int_to_ptr.vmem [resolvable:$true] %s234
          %237 = dma.hbm_to_vmem [thread:$0]  %s2, 64, %s235, [#allocation6]
        $region20: #{tpu_custom_call.1} parent=11 // pred_fallthru
          _
        // Predicated region
        $region21: #{tpu_custom_call.1} parent=11 // pred_check
          %p238 = pneg %p110
        $region22: #{tpu_custom_call.1} parent=11 // pred_check_branch
          %240 = sbr.rel (%p238) target = $region24
        $region23: #{tpu_custom_call.1} parent=11 // pred_region
          %s242 = ssub.s32 16384, 16384
          %243 = vsyncadd [#allocation9], %s242
          %s244 = sshll.u32 [#allocation8], 4
          %s245 = int_to_ptr.vmem [resolvable:$true] %s244
          %250 = dma.hbm_to_vmem [thread:$0]  %s3, 16384, %s245, [#allocation9], 256, 256, 16
        $region24: #{tpu_custom_call.1} parent=11 // pred_fallthru
          _
        // Predicated region
        $region25: #{tpu_custom_call.1} parent=11 // pred_check
          %p251 = pneg %p131
        $region26: #{tpu_custom_call.1} parent=11 // pred_check_branch
          %253 = sbr.rel (%p251) target = $region28
        $region27: #{tpu_custom_call.1} parent=11 // pred_region
          _
        $region28: #{tpu_custom_call.1} parent=11 // pred_fallthru
          _
        // Predicated region
        $region29: #{tpu_custom_call.1} parent=11 // pred_check
          %p254 = pneg %p152
        $region30: #{tpu_custom_call.1} parent=11 // pred_check_branch
          %256 = sbr.rel (%p254) target = $region32
        $region31: #{tpu_custom_call.1} parent=11 // pred_region
          %s258 = ssub.s32 4096, 4096
          %259 = vsyncadd [#allocation9], %s258
          %s260 = sshll.u32 [#allocation10], 4
          %s261 = int_to_ptr.vmem [resolvable:$true] %s260
          %266 = dma.hbm_to_vmem [thread:$0]  %s5, 4096, %s261, [#allocation9], 64, 64, 4
        $region32: #{tpu_custom_call.1} parent=11 // pred_fallthru
          _
        // Predicated region
        $region33: #{tpu_custom_call.1} parent=11 // pred_check
          %p267 = pneg %p173
        $region34: #{tpu_custom_call.1} parent=11 // pred_check_branch
          %269 = sbr.rel (%p267) target = $region36
        $region35: #{tpu_custom_call.1} parent=11 // pred_region
          _
        $region36: #{tpu_custom_call.1} parent=11 // pred_fallthru
          _
      $region12: #{tpu_custom_call.1} parent=5 // pred_fallthru
        _
      %p270 = scmp.lt.s32.totalorder %s21, 3
      // Predicated region
      $region37: #{tpu_custom_call.1} parent=5 // pred_check
        %p271 = pneg %p270
      $region38: #{tpu_custom_call.1} parent=5 // pred_check_branch
        %273 = sbr.rel (%p271) target = $region40
      $region39: #{tpu_custom_call.1} parent=5 // pred_region
        // Predicated region
        $region41: #{tpu_custom_call.1} parent=39 // pred_check
          %p274 = pneg %p41
        $region42: #{tpu_custom_call.1} parent=39 // pred_check_branch
          %276 = sbr.rel (%p274) target = $region44
        $region43: #{tpu_custom_call.1} parent=39 // pred_region
          %s277 = sand.u32 %s31, 1
          %s278 = scalar_lea.sflag [#allocation3], %s277
          %s279 = sand.u32 %s31, 1
          %s280 = smul.addr %s279, 64
          %s281 = scalar_lea.vmem [#allocation2], %s280
          %s283 = ssub.s32 1024, 1024
          %284 = vsyncadd %s278, %s283
          %s285 = smul.addr %s21, 8
          %s286 = smul.addr %s285, 128
          %s287 = scalar_lea.hbm %s0, %s286
          %s289 = sshll.u32 %s281, 4
          %s290 = int_to_ptr.vmem [resolvable:$true] %s289
          %292 = dma.hbm_to_vmem [thread:$0]  %s287, 1024, %s290, %s278
        $region44: #{tpu_custom_call.1} parent=39 // pred_fallthru
          _
      $region40: #{tpu_custom_call.1} parent=5 // pred_fallthru
        _
      %p293 = scmp.le.s32.totalorder 1, %s21
      %p294 = scmp.lt.s32.totalorder %s21, 4
      %p295 = pnand %p293, %p294
      %p296 = pneg %p295
      // Predicated region
      $region45: #{tpu_custom_call.1} parent=5 // pred_check
        _
      $region46: #{tpu_custom_call.1} parent=5 // pred_check_branch
        %298 = sbr.rel (%p295) target = $region48
      $region47: #{tpu_custom_call.1} parent=5 // pred_region
        %s299 = ssub.s32 %s21, 1
        %s300 = sand.u32 %s34, 1
        %s301 = scalar_lea.sflag [#allocation3], %s300
        %s302 = sand.u32 %s34, 1
        %s303 = smul.addr %s302, 64
        %s304 = scalar_lea.vmem [#allocation2], %s303
        // Predicated region
        $region49: #{tpu_custom_call.1} parent=47 // pred_check
          %p305 = pneg %p47
        $region50: #{tpu_custom_call.1} parent=47 // pred_check_branch
          %307 = sbr.rel (%p305) target = $region52
        $region51: #{tpu_custom_call.1} parent=47 // pred_region
          %308 = dma.done %s301, 1024
        $region52: #{tpu_custom_call.1} parent=47 // pred_fallthru
          _
        // Predicated region
        $region53: #{tpu_custom_call.1} parent=47 // pred_check
          %p309 = pneg %p68
        $region54: #{tpu_custom_call.1} parent=47 // pred_check_branch
          %311 = sbr.rel (%p309) target = $region56
        $region55: #{tpu_custom_call.1} parent=47 // pred_region
          %312 = dma.done [#allocation6], 32768
        $region56: #{tpu_custom_call.1} parent=47 // pred_fallthru
          _
        // Predicated region
        $region57: #{tpu_custom_call.1} parent=47 // pred_check
          %p313 = pneg %p89
        $region58: #{tpu_custom_call.1} parent=47 // pred_check_branch
          %315 = sbr.rel (%p313) target = $region60
        $region59: #{tpu_custom_call.1} parent=47 // pred_region
          %316 = dma.done [#allocation6], 64
        $region60: #{tpu_custom_call.1} parent=47 // pred_fallthru
          _
        // Predicated region
        $region61: #{tpu_custom_call.1} parent=47 // pred_check
          %p317 = pneg %p110
        $region62: #{tpu_custom_call.1} parent=47 // pred_check_branch
          %319 = sbr.rel (%p317) target = $region64
        $region63: #{tpu_custom_call.1} parent=47 // pred_region
          %320 = dma.done [#allocation9], 16384
        $region64: #{tpu_custom_call.1} parent=47 // pred_fallthru
          _
        // Predicated region
        $region65: #{tpu_custom_call.1} parent=47 // pred_check
          %p321 = pneg %p152
        $region66: #{tpu_custom_call.1} parent=47 // pred_check_branch
          %323 = sbr.rel (%p321) target = $region68
        $region67: #{tpu_custom_call.1} parent=47 // pred_region
          %324 = dma.done [#allocation9], 4096
        $region68: #{tpu_custom_call.1} parent=47 // pred_fallthru
          _
        %s325 = sand.u32 %s34, 1
        %s326 = scalar_lea.sflag [#allocation3], %s325
        %s327 = sand.u32 %s34, 1
        %s328 = smul.addr %s327, 64
        %s329 = scalar_lea.vmem [#allocation2], %s328
        %p330 = pneg %p47
        %p331 = pneg %p44
        %p332 = pneg %p68
        %p333 = pneg %p65
        %p334 = pneg %p89
        %p335 = pneg %p86
        %p336 = pneg %p110
        %p337 = pneg %p107
        %p338 = pneg %p131
        %p339 = pneg %p128
        %p340 = pneg %p152
        %p341 = pneg %p149
        %p342 = pneg %p173
        %p343 = pneg %p170
        %p344 = pneg %p199
        %p345 = pneg %p196
        %s346 = sand.u32 %s186, 1
        %s347 = scalar_lea.sflag [#allocation4], %s346
        %s348 = sand.u32 %s186, 1
        %s349 = smul.addr %s348, 8
        %s350 = scalar_lea.vmem [#allocation11], %s349
        %v352 = vld [vmem:[%s304] sm:$0xff]
        %v353 = vld [vmem:[%s304 + $0x8] sm:$0xff]
        %v354 = vld [vmem:[%s304 + $0x10] sm:$0xff]
        %v355 = vld [vmem:[%s304 + $0x18] sm:$0xff]
        %v356 = vld [vmem:[%s304 + $0x20] sm:$0xff]
        %v357 = vld [vmem:[%s304 + $0x28] sm:$0xff]
        %v358 = vld [vmem:[%s304 + $0x30] sm:$0xff]
        %v359 = vld [vmem:[%s304 + $0x38] sm:$0xff]
        %v360 = vpack.c.bf16 %v352, %v352
        %v361 = vpack.c.bf16 %v353, %v353
        %v362 = vpack.c.bf16 %v354, %v354
        %v363 = vpack.c.bf16 %v355, %v355
        %v364 = vpack.c.bf16 %v356, %v356
        %v365 = vpack.c.bf16 %v357, %v357
        %v366 = vpack.c.bf16 %v358, %v358
        %v367 = vpack.c.bf16 %v359, %v359
        %v368 = vld [vmem:[#allocation5] sm:$0xff]
        %v369 = vld [vmem:[#allocation5 + $0x8] sm:$0xff]
        %v370 = vld [vmem:[#allocation5 + $0x10] sm:$0xff]
        %v371 = vld [vmem:[#allocation5 + $0x18] sm:$0xff]
        %v372 = vld [vmem:[#allocation5 + $0x20] sm:$0xff]
        %v373 = vld [vmem:[#allocation5 + $0x28] sm:$0xff]
        %v374 = vld [vmem:[#allocation5 + $0x30] sm:$0xff]
        %v375 = vld [vmem:[#allocation5 + $0x38] sm:$0xff]
        %v376 = vld [vmem:[#allocation5 + $0x40] sm:$0xff]
        %v377 = vld [vmem:[#allocation5 + $0x48] sm:$0xff]
        %v378 = vld [vmem:[#allocation5 + $0x50] sm:$0xff]
        %v379 = vld [vmem:[#allocation5 + $0x58] sm:$0xff]
        %v380 = vld [vmem:[#allocation5 + $0x60] sm:$0xff]
        %v381 = vld [vmem:[#allocation5 + $0x68] sm:$0xff]
        %v382 = vld [vmem:[#allocation5 + $0x70] sm:$0xff]
        %v383 = vld [vmem:[#allocation5 + $0x78] sm:$0xff]
        %v384 = vld [vmem:[#allocation5 + $0x80] sm:$0xff]
        %v385 = vld [vmem:[#allocation5 + $0x88] sm:$0xff]
        %v386 = vld [vmem:[#allocation5 + $0x90] sm:$0xff]
        %v387 = vld [vmem:[#allocation5 + $0x98] sm:$0xff]
        %v388 = vld [vmem:[#allocation5 + $0xa0] sm:$0xff]
        %v389 = vld [vmem:[#allocation5 + $0xa8] sm:$0xff]
        %v390 = vld [vmem:[#allocation5 + $0xb0] sm:$0xff]
        %v391 = vld [vmem:[#allocation5 + $0xb8] sm:$0xff]
        %v392 = vld [vmem:[#allocation5 + $0xc0] sm:$0xff]
        %v393 = vld [vmem:[#allocation5 + $0xc8] sm:$0xff]
        %v394 = vld [vmem:[#allocation5 + $0xd0] sm:$0xff]
        %v395 = vld [vmem:[#allocation5 + $0xd8] sm:$0xff]
        %v396 = vld [vmem:[#allocation5 + $0xe0] sm:$0xff]
        %v397 = vld [vmem:[#allocation5 + $0xe8] sm:$0xff]
        %v398 = vld [vmem:[#allocation5 + $0xf0] sm:$0xff]
        %v399 = vld [vmem:[#allocation5 + $0xf8] sm:$0xff]
        %v400 = vld [vmem:[#allocation5 + $0x100] sm:$0xff]
        %v401 = vld [vmem:[#allocation5 + $0x108] sm:$0xff]
        %v402 = vld [vmem:[#allocation5 + $0x110] sm:$0xff]
        %v403 = vld [vmem:[#allocation5 + $0x118] sm:$0xff]
        %v404 = vld [vmem:[#allocation5 + $0x120] sm:$0xff]
        %v405 = vld [vmem:[#allocation5 + $0x128] sm:$0xff]
        %v406 = vld [vmem:[#allocation5 + $0x130] sm:$0xff]
        %v407 = vld [vmem:[#allocation5 + $0x138] sm:$0xff]
        %v408 = vld [vmem:[#allocation5 + $0x140] sm:$0xff]
        %v409 = vld [vmem:[#allocation5 + $0x148] sm:$0xff]
        %v410 = vld [vmem:[#allocation5 + $0x150] sm:$0xff]
        %v411 = vld [vmem:[#allocation5 + $0x158] sm:$0xff]
        %v412 = vld [vmem:[#allocation5 + $0x160] sm:$0xff]
        %v413 = vld [vmem:[#allocation5 + $0x168] sm:$0xff]
        %v414 = vld [vmem:[#allocation5 + $0x170] sm:$0xff]
        %v415 = vld [vmem:[#allocation5 + $0x178] sm:$0xff]
        %v416 = vld [vmem:[#allocation5 + $0x180] sm:$0xff]
        %v417 = vld [vmem:[#allocation5 + $0x188] sm:$0xff]
        %v418 = vld [vmem:[#allocation5 + $0x190] sm:$0xff]
        %v419 = vld [vmem:[#allocation5 + $0x198] sm:$0xff]
        %v420 = vld [vmem:[#allocation5 + $0x1a0] sm:$0xff]
        %v421 = vld [vmem:[#allocation5 + $0x1a8] sm:$0xff]
        %v422 = vld [vmem:[#allocation5 + $0x1b0] sm:$0xff]
        %v423 = vld [vmem:[#allocation5 + $0x1b8] sm:$0xff]
        %v424 = vld [vmem:[#allocation5 + $0x1c0] sm:$0xff]
        %v425 = vld [vmem:[#allocation5 + $0x1c8] sm:$0xff]
        %v426 = vld [vmem:[#allocation5 + $0x1d0] sm:$0xff]
        %v427 = vld [vmem:[#allocation5 + $0x1d8] sm:$0xff]
        %v428 = vld [vmem:[#allocation5 + $0x1e0] sm:$0xff]
        %v429 = vld [vmem:[#allocation5 + $0x1e8] sm:$0xff]
        %v430 = vld [vmem:[#allocation5 + $0x1f0] sm:$0xff]
        %v431 = vld [vmem:[#allocation5 + $0x1f8] sm:$0xff]
        %v432 = vld [vmem:[#allocation5 + $0x200] sm:$0xff]
        %v433 = vld [vmem:[#allocation5 + $0x208] sm:$0xff]
        %v434 = vld [vmem:[#allocation5 + $0x210] sm:$0xff]
        %v435 = vld [vmem:[#allocation5 + $0x218] sm:$0xff]
        %v436 = vld [vmem:[#allocation5 + $0x220] sm:$0xff]
        %v437 = vld [vmem:[#allocation5 + $0x228] sm:$0xff]
        %v438 = vld [vmem:[#allocation5 + $0x230] sm:$0xff]
        %v439 = vld [vmem:[#allocation5 + $0x238] sm:$0xff]
        %v440 = vld [vmem:[#allocation5 + $0x240] sm:$0xff]
        %v441 = vld [vmem:[#allocation5 + $0x248] sm:$0xff]
        %v442 = vld [vmem:[#allocation5 + $0x250] sm:$0xff]
        %v443 = vld [vmem:[#allocation5 + $0x258] sm:$0xff]
        %v444 = vld [vmem:[#allocation5 + $0x260] sm:$0xff]
        %v445 = vld [vmem:[#allocation5 + $0x268] sm:$0xff]
        %v446 = vld [vmem:[#allocation5 + $0x270] sm:$0xff]
        %v447 = vld [vmem:[#allocation5 + $0x278] sm:$0xff]
        %v448 = vld [vmem:[#allocation5 + $0x280] sm:$0xff]
        %v449 = vld [vmem:[#allocation5 + $0x288] sm:$0xff]
        %v450 = vld [vmem:[#allocation5 + $0x290] sm:$0xff]
        %v451 = vld [vmem:[#allocation5 + $0x298] sm:$0xff]
        %v452 = vld [vmem:[#allocation5 + $0x2a0] sm:$0xff]
        %v453 = vld [vmem:[#allocation5 + $0x2a8] sm:$0xff]
        %v454 = vld [vmem:[#allocation5 + $0x2b0] sm:$0xff]
        %v455 = vld [vmem:[#allocation5 + $0x2b8] sm:$0xff]
        %v456 = vld [vmem:[#allocation5 + $0x2c0] sm:$0xff]
        %v457 = vld [vmem:[#allocation5 + $0x2c8] sm:$0xff]
        %v458 = vld [vmem:[#allocation5 + $0x2d0] sm:$0xff]
        %v459 = vld [vmem:[#allocation5 + $0x2d8] sm:$0xff]
        %v460 = vld [vmem:[#allocation5 + $0x2e0] sm:$0xff]
        %v461 = vld [vmem:[#allocation5 + $0x2e8] sm:$0xff]
        %v462 = vld [vmem:[#allocation5 + $0x2f0] sm:$0xff]
        %v463 = vld [vmem:[#allocation5 + $0x2f8] sm:$0xff]
        %v464 = vld [vmem:[#allocation5 + $0x300] sm:$0xff]
        %v465 = vld [vmem:[#allocation5 + $0x308] sm:$0xff]
        %v466 = vld [vmem:[#allocation5 + $0x310] sm:$0xff]
        %v467 = vld [vmem:[#allocation5 + $0x318] sm:$0xff]
        %v468 = vld [vmem:[#allocation5 + $0x320] sm:$0xff]
        %v469 = vld [vmem:[#allocation5 + $0x328] sm:$0xff]
        %v470 = vld [vmem:[#allocation5 + $0x330] sm:$0xff]
        %v471 = vld [vmem:[#allocation5 + $0x338] sm:$0xff]
        %v472 = vld [vmem:[#allocation5 + $0x340] sm:$0xff]
        %v473 = vld [vmem:[#allocation5 + $0x348] sm:$0xff]
        %v474 = vld [vmem:[#allocation5 + $0x350] sm:$0xff]
        %v475 = vld [vmem:[#allocation5 + $0x358] sm:$0xff]
        %v476 = vld [vmem:[#allocation5 + $0x360] sm:$0xff]
        %v477 = vld [vmem:[#allocation5 + $0x368] sm:$0xff]
        %v478 = vld [vmem:[#allocation5 + $0x370] sm:$0xff]
        %v479 = vld [vmem:[#allocation5 + $0x378] sm:$0xff]
        %v480 = vld [vmem:[#allocation5 + $0x380] sm:$0xff]
        %v481 = vld [vmem:[#allocation5 + $0x388] sm:$0xff]
        %v482 = vld [vmem:[#allocation5 + $0x390] sm:$0xff]
        %v483 = vld [vmem:[#allocation5 + $0x398] sm:$0xff]
        %v484 = vld [vmem:[#allocation5 + $0x3a0] sm:$0xff]
        %v485 = vld [vmem:[#allocation5 + $0x3a8] sm:$0xff]
        %v486 = vld [vmem:[#allocation5 + $0x3b0] sm:$0xff]
        %v487 = vld [vmem:[#allocation5 + $0x3b8] sm:$0xff]
        %v488 = vld [vmem:[#allocation5 + $0x3c0] sm:$0xff]
        %v489 = vld [vmem:[#allocation5 + $0x3c8] sm:$0xff]
        %v490 = vld [vmem:[#allocation5 + $0x3d0] sm:$0xff]
        %v491 = vld [vmem:[#allocation5 + $0x3d8] sm:$0xff]
        %v492 = vld [vmem:[#allocation5 + $0x3e0] sm:$0xff]
        %v493 = vld [vmem:[#allocation5 + $0x3e8] sm:$0xff]
        %v494 = vld [vmem:[#allocation5 + $0x3f0] sm:$0xff]
        %v495 = vld [vmem:[#allocation5 + $0x3f8] sm:$0xff]
        %v496 = vld [vmem:[#allocation5 + $0x400] sm:$0xff]
        %v497 = vld [vmem:[#allocation5 + $0x408] sm:$0xff]
        %v498 = vld [vmem:[#allocation5 + $0x410] sm:$0xff]
        %v499 = vld [vmem:[#allocation5 + $0x418] sm:$0xff]
        %v500 = vld [vmem:[#allocation5 + $0x420] sm:$0xff]
        %v501 = vld [vmem:[#allocation5 + $0x428] sm:$0xff]
        %v502 = vld [vmem:[#allocation5 + $0x430] sm:$0xff]
        %v503 = vld [vmem:[#allocation5 + $0x438] sm:$0xff]
        %v504 = vld [vmem:[#allocation5 + $0x440] sm:$0xff]
        %v505 = vld [vmem:[#allocation5 + $0x448] sm:$0xff]
        %v506 = vld [vmem:[#allocation5 + $0x450] sm:$0xff]
        %v507 = vld [vmem:[#allocation5 + $0x458] sm:$0xff]
        %v508 = vld [vmem:[#allocation5 + $0x460] sm:$0xff]
        %v509 = vld [vmem:[#allocation5 + $0x468] sm:$0xff]
        %v510 = vld [vmem:[#allocation5 + $0x470] sm:$0xff]
        %v511 = vld [vmem:[#allocation5 + $0x478] sm:$0xff]
        %v512 = vld [vmem:[#allocation5 + $0x480] sm:$0xff]
        %v513 = vld [vmem:[#allocation5 + $0x488] sm:$0xff]
        %v514 = vld [vmem:[#allocation5 + $0x490] sm:$0xff]
        %v515 = vld [vmem:[#allocation5 + $0x498] sm:$0xff]
        %v516 = vld [vmem:[#allocation5 + $0x4a0] sm:$0xff]
        %v517 = vld [vmem:[#allocation5 + $0x4a8] sm:$0xff]
        %v518 = vld [vmem:[#allocation5 + $0x4b0] sm:$0xff]
        %v519 = vld [vmem:[#allocation5 + $0x4b8] sm:$0xff]
        %v520 = vld [vmem:[#allocation5 + $0x4c0] sm:$0xff]
        %v521 = vld [vmem:[#allocation5 + $0x4c8] sm:$0xff]
        %v522 = vld [vmem:[#allocation5 + $0x4d0] sm:$0xff]
        %v523 = vld [vmem:[#allocation5 + $0x4d8] sm:$0xff]
        %v524 = vld [vmem:[#allocation5 + $0x4e0] sm:$0xff]
        %v525 = vld [vmem:[#allocation5 + $0x4e8] sm:$0xff]
        %v526 = vld [vmem:[#allocation5 + $0x4f0] sm:$0xff]
        %v527 = vld [vmem:[#allocation5 + $0x4f8] sm:$0xff]
        %v528 = vld [vmem:[#allocation5 + $0x500] sm:$0xff]
        %v529 = vld [vmem:[#allocation5 + $0x508] sm:$0xff]
        %v530 = vld [vmem:[#allocation5 + $0x510] sm:$0xff]
        %v531 = vld [vmem:[#allocation5 + $0x518] sm:$0xff]
        %v532 = vld [vmem:[#allocation5 + $0x520] sm:$0xff]
        %v533 = vld [vmem:[#allocation5 + $0x528] sm:$0xff]
        %v534 = vld [vmem:[#allocation5 + $0x530] sm:$0xff]
        %v535 = vld [vmem:[#allocation5 + $0x538] sm:$0xff]
        %v536 = vld [vmem:[#allocation5 + $0x540] sm:$0xff]
        %v537 = vld [vmem:[#allocation5 + $0x548] sm:$0xff]
        %v538 = vld [vmem:[#allocation5 + $0x550] sm:$0xff]
        %v539 = vld [vmem:[#allocation5 + $0x558] sm:$0xff]
        %v540 = vld [vmem:[#allocation5 + $0x560] sm:$0xff]
        %v541 = vld [vmem:[#allocation5 + $0x568] sm:$0xff]
        %v542 = vld [vmem:[#allocation5 + $0x570] sm:$0xff]
        %v543 = vld [vmem:[#allocation5 + $0x578] sm:$0xff]
        %v544 = vld [vmem:[#allocation5 + $0x580] sm:$0xff]
        %v545 = vld [vmem:[#allocation5 + $0x588] sm:$0xff]
        %v546 = vld [vmem:[#allocation5 + $0x590] sm:$0xff]
        %v547 = vld [vmem:[#allocation5 + $0x598] sm:$0xff]
        %v548 = vld [vmem:[#allocation5 + $0x5a0] sm:$0xff]
        %v549 = vld [vmem:[#allocation5 + $0x5a8] sm:$0xff]
        %v550 = vld [vmem:[#allocation5 + $0x5b0] sm:$0xff]
        %v551 = vld [vmem:[#allocation5 + $0x5b8] sm:$0xff]
        %v552 = vld [vmem:[#allocation5 + $0x5c0] sm:$0xff]
        %v553 = vld [vmem:[#allocation5 + $0x5c8] sm:$0xff]
        %v554 = vld [vmem:[#allocation5 + $0x5d0] sm:$0xff]
        %v555 = vld [vmem:[#allocation5 + $0x5d8] sm:$0xff]
        %v556 = vld [vmem:[#allocation5 + $0x5e0] sm:$0xff]
        %v557 = vld [vmem:[#allocation5 + $0x5e8] sm:$0xff]
        %v558 = vld [vmem:[#allocation5 + $0x5f0] sm:$0xff]
        %v559 = vld [vmem:[#allocation5 + $0x5f8] sm:$0xff]
        %v560 = vld [vmem:[#allocation5 + $0x600] sm:$0xff]
        %v561 = vld [vmem:[#allocation5 + $0x608] sm:$0xff]
        %v562 = vld [vmem:[#allocation5 + $0x610] sm:$0xff]
        %v563 = vld [vmem:[#allocation5 + $0x618] sm:$0xff]
        %v564 = vld [vmem:[#allocation5 + $0x620] sm:$0xff]
        %v565 = vld [vmem:[#allocation5 + $0x628] sm:$0xff]
        %v566 = vld [vmem:[#allocation5 + $0x630] sm:$0xff]
        %v567 = vld [vmem:[#allocation5 + $0x638] sm:$0xff]
        %v568 = vld [vmem:[#allocation5 + $0x640] sm:$0xff]
        %v569 = vld [vmem:[#allocation5 + $0x648] sm:$0xff]
        %v570 = vld [vmem:[#allocation5 + $0x650] sm:$0xff]
        %v571 = vld [vmem:[#allocation5 + $0x658] sm:$0xff]
        %v572 = vld [vmem:[#allocation5 + $0x660] sm:$0xff]
        %v573 = vld [vmem:[#allocation5 + $0x668] sm:$0xff]
        %v574 = vld [vmem:[#allocation5 + $0x670] sm:$0xff]
        %v575 = vld [vmem:[#allocation5 + $0x678] sm:$0xff]
        %v576 = vld [vmem:[#allocation5 + $0x680] sm:$0xff]
        %v577 = vld [vmem:[#allocation5 + $0x688] sm:$0xff]
        %v578 = vld [vmem:[#allocation5 + $0x690] sm:$0xff]
        %v579 = vld [vmem:[#allocation5 + $0x698] sm:$0xff]
        %v580 = vld [vmem:[#allocation5 + $0x6a0] sm:$0xff]
        %v581 = vld [vmem:[#allocation5 + $0x6a8] sm:$0xff]
        %v582 = vld [vmem:[#allocation5 + $0x6b0] sm:$0xff]
        %v583 = vld [vmem:[#allocation5 + $0x6b8] sm:$0xff]
        %v584 = vld [vmem:[#allocation5 + $0x6c0] sm:$0xff]
        %v585 = vld [vmem:[#allocation5 + $0x6c8] sm:$0xff]
        %v586 = vld [vmem:[#allocation5 + $0x6d0] sm:$0xff]
        %v587 = vld [vmem:[#allocation5 + $0x6d8] sm:$0xff]
        %v588 = vld [vmem:[#allocation5 + $0x6e0] sm:$0xff]
        %v589 = vld [vmem:[#allocation5 + $0x6e8] sm:$0xff]
        %v590 = vld [vmem:[#allocation5 + $0x6f0] sm:$0xff]
        %v591 = vld [vmem:[#allocation5 + $0x6f8] sm:$0xff]
        %v592 = vld [vmem:[#allocation5 + $0x700] sm:$0xff]
        %v593 = vld [vmem:[#allocation5 + $0x708] sm:$0xff]
        %v594 = vld [vmem:[#allocation5 + $0x710] sm:$0xff]
        %v595 = vld [vmem:[#allocation5 + $0x718] sm:$0xff]
        %v596 = vld [vmem:[#allocation5 + $0x720] sm:$0xff]
        %v597 = vld [vmem:[#allocation5 + $0x728] sm:$0xff]
        %v598 = vld [vmem:[#allocation5 + $0x730] sm:$0xff]
        %v599 = vld [vmem:[#allocation5 + $0x738] sm:$0xff]
        %v600 = vld [vmem:[#allocation5 + $0x740] sm:$0xff]
        %v601 = vld [vmem:[#allocation5 + $0x748] sm:$0xff]
        %v602 = vld [vmem:[#allocation5 + $0x750] sm:$0xff]
        %v603 = vld [vmem:[#allocation5 + $0x758] sm:$0xff]
        %v604 = vld [vmem:[#allocation5 + $0x760] sm:$0xff]
        %v605 = vld [vmem:[#allocation5 + $0x768] sm:$0xff]
        %v606 = vld [vmem:[#allocation5 + $0x770] sm:$0xff]
        %v607 = vld [vmem:[#allocation5 + $0x778] sm:$0xff]
        %v608 = vld [vmem:[#allocation5 + $0x780] sm:$0xff]
        %v609 = vld [vmem:[#allocation5 + $0x788] sm:$0xff]
        %v610 = vld [vmem:[#allocation5 + $0x790] sm:$0xff]
        %v611 = vld [vmem:[#allocation5 + $0x798] sm:$0xff]
        %v612 = vld [vmem:[#allocation5 + $0x7a0] sm:$0xff]
        %v613 = vld [vmem:[#allocation5 + $0x7a8] sm:$0xff]
        %v614 = vld [vmem:[#allocation5 + $0x7b0] sm:$0xff]
        %v615 = vld [vmem:[#allocation5 + $0x7b8] sm:$0xff]
        %v616 = vld [vmem:[#allocation5 + $0x7c0] sm:$0xff]
        %v617 = vld [vmem:[#allocation5 + $0x7c8] sm:$0xff]
        %v618 = vld [vmem:[#allocation5 + $0x7d0] sm:$0xff]
        %v619 = vld [vmem:[#allocation5 + $0x7d8] sm:$0xff]
        %v620 = vld [vmem:[#allocation5 + $0x7e0] sm:$0xff]
        %v621 = vld [vmem:[#allocation5 + $0x7e8] sm:$0xff]
        %v622 = vld [vmem:[#allocation5 + $0x7f0] sm:$0xff]
        %v623 = vld [vmem:[#allocation5 + $0x7f8] sm:$0xff]
        %v624 = vld [vmem:[#allocation7] sm:$0xf]
        %v626 = vlaneseq
        %v627 = vshrl.u32 %v626, 7
        %v628 = vsub.s32 0, %v627
        %v629 = vrot.slane %v624, %v628
        %v630 = vlaneseq
        %v631 = vshrl.u32 %v630, 7
        %v632 = vsub.s32 1, %v631
        %v633 = vrot.slane %v624, %v632
        %v634 = vlaneseq
        %v635 = vshrl.u32 %v634, 7
        %v636 = vsub.s32 2, %v635
        %v637 = vrot.slane %v624, %v636
        %v638 = vlaneseq
        %v639 = vshrl.u32 %v638, 7
        %v640 = vsub.s32 3, %v639
        %v641 = vrot.slane %v624, %v640
        %v902 = vunpack.c.l.b16 %v368
        %v903 = vunpack.c.h.b16 %v368
        %v904 = vunpack.c.l.b16 %v369
        %v905 = vunpack.c.h.b16 %v369
        %v906 = vunpack.c.l.b16 %v370
        %v907 = vunpack.c.h.b16 %v370
        %v908 = vunpack.c.l.b16 %v371
        %v909 = vunpack.c.h.b16 %v371
        %v910 = vunpack.c.l.b16 %v372
        %v911 = vunpack.c.h.b16 %v372
        %v912 = vunpack.c.l.b16 %v373
        %v913 = vunpack.c.h.b16 %v373
        %v914 = vunpack.c.l.b16 %v374
        %v915 = vunpack.c.h.b16 %v374
        %v916 = vunpack.c.l.b16 %v375
        %v917 = vunpack.c.h.b16 %v375
        %v918 = vunpack.c.l.b16 %v376
        %v919 = vunpack.c.h.b16 %v376
        %v920 = vunpack.c.l.b16 %v377
        %v921 = vunpack.c.h.b16 %v377
        %v922 = vunpack.c.l.b16 %v378
        %v923 = vunpack.c.h.b16 %v378
        %v924 = vunpack.c.l.b16 %v379
        %v925 = vunpack.c.h.b16 %v379
        %v926 = vunpack.c.l.b16 %v380
        %v927 = vunpack.c.h.b16 %v380
        %v928 = vunpack.c.l.b16 %v381
        %v929 = vunpack.c.h.b16 %v381
        %v930 = vunpack.c.l.b16 %v382
        %v931 = vunpack.c.h.b16 %v382
        %v932 = vunpack.c.l.b16 %v383
        %v933 = vunpack.c.h.b16 %v383
        %v934 = vunpack.c.l.b16 %v384
        %v935 = vunpack.c.h.b16 %v384
        %v936 = vunpack.c.l.b16 %v385
        %v937 = vunpack.c.h.b16 %v385
        %v938 = vunpack.c.l.b16 %v386
        %v939 = vunpack.c.h.b16 %v386
        %v940 = vunpack.c.l.b16 %v387
        %v941 = vunpack.c.h.b16 %v387
        %v942 = vunpack.c.l.b16 %v388
        %v943 = vunpack.c.h.b16 %v388
        %v944 = vunpack.c.l.b16 %v389
        %v945 = vunpack.c.h.b16 %v389
        %v946 = vunpack.c.l.b16 %v390
        %v947 = vunpack.c.h.b16 %v390
        %v948 = vunpack.c.l.b16 %v391
        %v949 = vunpack.c.h.b16 %v391
        %v950 = vunpack.c.l.b16 %v392
        %v951 = vunpack.c.h.b16 %v392
        %v952 = vunpack.c.l.b16 %v393
        %v953 = vunpack.c.h.b16 %v393
        %v954 = vunpack.c.l.b16 %v394
        %v955 = vunpack.c.h.b16 %v394
        %v956 = vunpack.c.l.b16 %v395
        %v957 = vunpack.c.h.b16 %v395
        %v958 = vunpack.c.l.b16 %v396
        %v959 = vunpack.c.h.b16 %v396
        %v960 = vunpack.c.l.b16 %v397
        %v961 = vunpack.c.h.b16 %v397
        %v962 = vunpack.c.l.b16 %v398
        %v963 = vunpack.c.h.b16 %v398
        %v964 = vunpack.c.l.b16 %v399
        %v965 = vunpack.c.h.b16 %v399
        %v966 = vunpack.c.l.b16 %v400
        %v967 = vunpack.c.h.b16 %v400
        %v968 = vunpack.c.l.b16 %v401
        %v969 = vunpack.c.h.b16 %v401
        %v970 = vunpack.c.l.b16 %v402
        %v971 = vunpack.c.h.b16 %v402
        %v972 = vunpack.c.l.b16 %v403
        %v973 = vunpack.c.h.b16 %v403
        %v974 = vunpack.c.l.b16 %v404
        %v975 = vunpack.c.h.b16 %v404
        %v976 = vunpack.c.l.b16 %v405
        %v977 = vunpack.c.h.b16 %v405
        %v978 = vunpack.c.l.b16 %v406
        %v979 = vunpack.c.h.b16 %v406
        %v980 = vunpack.c.l.b16 %v407
        %v981 = vunpack.c.h.b16 %v407
        %v982 = vunpack.c.l.b16 %v408
        %v983 = vunpack.c.h.b16 %v408
        %v984 = vunpack.c.l.b16 %v409
        %v985 = vunpack.c.h.b16 %v409
        %v986 = vunpack.c.l.b16 %v410
        %v987 = vunpack.c.h.b16 %v410
        %v988 = vunpack.c.l.b16 %v411
        %v989 = vunpack.c.h.b16 %v411
        %v990 = vunpack.c.l.b16 %v412
        %v991 = vunpack.c.h.b16 %v412
        %v992 = vunpack.c.l.b16 %v413
        %v993 = vunpack.c.h.b16 %v413
        %v994 = vunpack.c.l.b16 %v414
        %v995 = vunpack.c.h.b16 %v414
        %v996 = vunpack.c.l.b16 %v415
        %v997 = vunpack.c.h.b16 %v415
        %v998 = vunpack.c.l.b16 %v416
        %v999 = vunpack.c.h.b16 %v416
        %v1000 = vunpack.c.l.b16 %v417
        %v1001 = vunpack.c.h.b16 %v417
        %v1002 = vunpack.c.l.b16 %v418
        %v1003 = vunpack.c.h.b16 %v418
        %v1004 = vunpack.c.l.b16 %v419
        %v1005 = vunpack.c.h.b16 %v419
        %v1006 = vunpack.c.l.b16 %v420
        %v1007 = vunpack.c.h.b16 %v420
        %v1008 = vunpack.c.l.b16 %v421
        %v1009 = vunpack.c.h.b16 %v421
        %v1010 = vunpack.c.l.b16 %v422
        %v1011 = vunpack.c.h.b16 %v422
        %v1012 = vunpack.c.l.b16 %v423
        %v1013 = vunpack.c.h.b16 %v423
        %v1014 = vunpack.c.l.b16 %v424
        %v1015 = vunpack.c.h.b16 %v424
        %v1016 = vunpack.c.l.b16 %v425
        %v1017 = vunpack.c.h.b16 %v425
        %v1018 = vunpack.c.l.b16 %v426
        %v1019 = vunpack.c.h.b16 %v426
        %v1020 = vunpack.c.l.b16 %v427
        %v1021 = vunpack.c.h.b16 %v427
        %v1022 = vunpack.c.l.b16 %v428
        %v1023 = vunpack.c.h.b16 %v428
        %v1024 = vunpack.c.l.b16 %v429
        %v1025 = vunpack.c.h.b16 %v429
        %v1026 = vunpack.c.l.b16 %v430
        %v1027 = vunpack.c.h.b16 %v430
        %v1028 = vunpack.c.l.b16 %v431
        %v1029 = vunpack.c.h.b16 %v431
        %v1030 = vunpack.c.l.b16 %v432
        %v1031 = vunpack.c.h.b16 %v432
        %v1032 = vunpack.c.l.b16 %v433
        %v1033 = vunpack.c.h.b16 %v433
        %v1034 = vunpack.c.l.b16 %v434
        %v1035 = vunpack.c.h.b16 %v434
        %v1036 = vunpack.c.l.b16 %v435
        %v1037 = vunpack.c.h.b16 %v435
        %v1038 = vunpack.c.l.b16 %v436
        %v1039 = vunpack.c.h.b16 %v436
        %v1040 = vunpack.c.l.b16 %v437
        %v1041 = vunpack.c.h.b16 %v437
        %v1042 = vunpack.c.l.b16 %v438
        %v1043 = vunpack.c.h.b16 %v438
        %v1044 = vunpack.c.l.b16 %v439
        %v1045 = vunpack.c.h.b16 %v439
        %v1046 = vunpack.c.l.b16 %v440
        %v1047 = vunpack.c.h.b16 %v440
        %v1048 = vunpack.c.l.b16 %v441
        %v1049 = vunpack.c.h.b16 %v441
        %v1050 = vunpack.c.l.b16 %v442
        %v1051 = vunpack.c.h.b16 %v442
        %v1052 = vunpack.c.l.b16 %v443
        %v1053 = vunpack.c.h.b16 %v443
        %v1054 = vunpack.c.l.b16 %v444
        %v1055 = vunpack.c.h.b16 %v444
        %v1056 = vunpack.c.l.b16 %v445
        %v1057 = vunpack.c.h.b16 %v445
        %v1058 = vunpack.c.l.b16 %v446
        %v1059 = vunpack.c.h.b16 %v446
        %v1060 = vunpack.c.l.b16 %v447
        %v1061 = vunpack.c.h.b16 %v447
        %v1062 = vunpack.c.l.b16 %v448
        %v1063 = vunpack.c.h.b16 %v448
        %v1064 = vunpack.c.l.b16 %v449
        %v1065 = vunpack.c.h.b16 %v449
        %v1066 = vunpack.c.l.b16 %v450
        %v1067 = vunpack.c.h.b16 %v450
        %v1068 = vunpack.c.l.b16 %v451
        %v1069 = vunpack.c.h.b16 %v451
        %v1070 = vunpack.c.l.b16 %v452
        %v1071 = vunpack.c.h.b16 %v452
        %v1072 = vunpack.c.l.b16 %v453
        %v1073 = vunpack.c.h.b16 %v453
        %v1074 = vunpack.c.l.b16 %v454
        %v1075 = vunpack.c.h.b16 %v454
        %v1076 = vunpack.c.l.b16 %v455
        %v1077 = vunpack.c.h.b16 %v455
        %v1078 = vunpack.c.l.b16 %v456
        %v1079 = vunpack.c.h.b16 %v456
        %v1080 = vunpack.c.l.b16 %v457
        %v1081 = vunpack.c.h.b16 %v457
        %v1082 = vunpack.c.l.b16 %v458
        %v1083 = vunpack.c.h.b16 %v458
        %v1084 = vunpack.c.l.b16 %v459
        %v1085 = vunpack.c.h.b16 %v459
        %v1086 = vunpack.c.l.b16 %v460
        %v1087 = vunpack.c.h.b16 %v460
        %v1088 = vunpack.c.l.b16 %v461
        %v1089 = vunpack.c.h.b16 %v461
        %v1090 = vunpack.c.l.b16 %v462
        %v1091 = vunpack.c.h.b16 %v462
        %v1092 = vunpack.c.l.b16 %v463
        %v1093 = vunpack.c.h.b16 %v463
        %v1094 = vunpack.c.l.b16 %v464
        %v1095 = vunpack.c.h.b16 %v464
        %v1096 = vunpack.c.l.b16 %v465
        %v1097 = vunpack.c.h.b16 %v465
        %v1098 = vunpack.c.l.b16 %v466
        %v1099 = vunpack.c.h.b16 %v466
        %v1100 = vunpack.c.l.b16 %v467
        %v1101 = vunpack.c.h.b16 %v467
        %v1102 = vunpack.c.l.b16 %v468
        %v1103 = vunpack.c.h.b16 %v468
        %v1104 = vunpack.c.l.b16 %v469
        %v1105 = vunpack.c.h.b16 %v469
        %v1106 = vunpack.c.l.b16 %v470
        %v1107 = vunpack.c.h.b16 %v470
        %v1108 = vunpack.c.l.b16 %v471
        %v1109 = vunpack.c.h.b16 %v471
        %v1110 = vunpack.c.l.b16 %v472
        %v1111 = vunpack.c.h.b16 %v472
        %v1112 = vunpack.c.l.b16 %v473
        %v1113 = vunpack.c.h.b16 %v473
        %v1114 = vunpack.c.l.b16 %v474
        %v1115 = vunpack.c.h.b16 %v474
        %v1116 = vunpack.c.l.b16 %v475
        %v1117 = vunpack.c.h.b16 %v475
        %v1118 = vunpack.c.l.b16 %v476
        %v1119 = vunpack.c.h.b16 %v476
        %v1120 = vunpack.c.l.b16 %v477
        %v1121 = vunpack.c.h.b16 %v477
        %v1122 = vunpack.c.l.b16 %v478
        %v1123 = vunpack.c.h.b16 %v478
        %v1124 = vunpack.c.l.b16 %v479
        %v1125 = vunpack.c.h.b16 %v479
        %v1126 = vunpack.c.l.b16 %v480
        %v1127 = vunpack.c.h.b16 %v480
        %v1128 = vunpack.c.l.b16 %v481
        %v1129 = vunpack.c.h.b16 %v481
        %v1130 = vunpack.c.l.b16 %v482
        %v1131 = vunpack.c.h.b16 %v482
        %v1132 = vunpack.c.l.b16 %v483
        %v1133 = vunpack.c.h.b16 %v483
        %v1134 = vunpack.c.l.b16 %v484
        %v1135 = vunpack.c.h.b16 %v484
        %v1136 = vunpack.c.l.b16 %v485
        %v1137 = vunpack.c.h.b16 %v485
        %v1138 = vunpack.c.l.b16 %v486
        %v1139 = vunpack.c.h.b16 %v486
        %v1140 = vunpack.c.l.b16 %v487
        %v1141 = vunpack.c.h.b16 %v487
        %v1142 = vunpack.c.l.b16 %v488
        %v1143 = vunpack.c.h.b16 %v488
        %v1144 = vunpack.c.l.b16 %v489
        %v1145 = vunpack.c.h.b16 %v489
        %v1146 = vunpack.c.l.b16 %v490
        %v1147 = vunpack.c.h.b16 %v490
        %v1148 = vunpack.c.l.b16 %v491
        %v1149 = vunpack.c.h.b16 %v491
        %v1150 = vunpack.c.l.b16 %v492
        %v1151 = vunpack.c.h.b16 %v492
        %v1152 = vunpack.c.l.b16 %v493
        %v1153 = vunpack.c.h.b16 %v493
        %v1154 = vunpack.c.l.b16 %v494
        %v1155 = vunpack.c.h.b16 %v494
        %v1156 = vunpack.c.l.b16 %v495
        %v1157 = vunpack.c.h.b16 %v495
        %v1158 = vunpack.c.l.b16 %v496
        %v1159 = vunpack.c.h.b16 %v496
        %v1160 = vunpack.c.l.b16 %v497
        %v1161 = vunpack.c.h.b16 %v497
        %v1162 = vunpack.c.l.b16 %v498
        %v1163 = vunpack.c.h.b16 %v498
        %v1164 = vunpack.c.l.b16 %v499
        %v1165 = vunpack.c.h.b16 %v499
        %v1166 = vunpack.c.l.b16 %v500
        %v1167 = vunpack.c.h.b16 %v500
        %v1168 = vunpack.c.l.b16 %v501
        %v1169 = vunpack.c.h.b16 %v501
        %v1170 = vunpack.c.l.b16 %v502
        %v1171 = vunpack.c.h.b16 %v502
        %v1172 = vunpack.c.l.b16 %v503
        %v1173 = vunpack.c.h.b16 %v503
        %v1174 = vunpack.c.l.b16 %v504
        %v1175 = vunpack.c.h.b16 %v504
        %v1176 = vunpack.c.l.b16 %v505
        %v1177 = vunpack.c.h.b16 %v505
        %v1178 = vunpack.c.l.b16 %v506
        %v1179 = vunpack.c.h.b16 %v506
        %v1180 = vunpack.c.l.b16 %v507
        %v1181 = vunpack.c.h.b16 %v507
        %v1182 = vunpack.c.l.b16 %v508
        %v1183 = vunpack.c.h.b16 %v508
        %v1184 = vunpack.c.l.b16 %v509
        %v1185 = vunpack.c.h.b16 %v509
        %v1186 = vunpack.c.l.b16 %v510
        %v1187 = vunpack.c.h.b16 %v510
        %v1188 = vunpack.c.l.b16 %v511
        %v1189 = vunpack.c.h.b16 %v511
        %v1190 = vunpack.c.l.b16 %v512
        %v1191 = vunpack.c.h.b16 %v512
        %v1192 = vunpack.c.l.b16 %v513
        %v1193 = vunpack.c.h.b16 %v513
        %v1194 = vunpack.c.l.b16 %v514
        %v1195 = vunpack.c.h.b16 %v514
        %v1196 = vunpack.c.l.b16 %v515
        %v1197 = vunpack.c.h.b16 %v515
        %v1198 = vunpack.c.l.b16 %v516
        %v1199 = vunpack.c.h.b16 %v516
        %v1200 = vunpack.c.l.b16 %v517
        %v1201 = vunpack.c.h.b16 %v517
        %v1202 = vunpack.c.l.b16 %v518
        %v1203 = vunpack.c.h.b16 %v518
        %v1204 = vunpack.c.l.b16 %v519
        %v1205 = vunpack.c.h.b16 %v519
        %v1206 = vunpack.c.l.b16 %v520
        %v1207 = vunpack.c.h.b16 %v520
        %v1208 = vunpack.c.l.b16 %v521
        %v1209 = vunpack.c.h.b16 %v521
        %v1210 = vunpack.c.l.b16 %v522
        %v1211 = vunpack.c.h.b16 %v522
        %v1212 = vunpack.c.l.b16 %v523
        %v1213 = vunpack.c.h.b16 %v523
        %v1214 = vunpack.c.l.b16 %v524
        %v1215 = vunpack.c.h.b16 %v524
        %v1216 = vunpack.c.l.b16 %v525
        %v1217 = vunpack.c.h.b16 %v525
        %v1218 = vunpack.c.l.b16 %v526
        %v1219 = vunpack.c.h.b16 %v526
        %v1220 = vunpack.c.l.b16 %v527
        %v1221 = vunpack.c.h.b16 %v527
        %v1222 = vunpack.c.l.b16 %v528
        %v1223 = vunpack.c.h.b16 %v528
        %v1224 = vunpack.c.l.b16 %v529
        %v1225 = vunpack.c.h.b16 %v529
        %v1226 = vunpack.c.l.b16 %v530
        %v1227 = vunpack.c.h.b16 %v530
        %v1228 = vunpack.c.l.b16 %v531
        %v1229 = vunpack.c.h.b16 %v531
        %v1230 = vunpack.c.l.b16 %v532
        %v1231 = vunpack.c.h.b16 %v532
        %v1232 = vunpack.c.l.b16 %v533
        %v1233 = vunpack.c.h.b16 %v533
        %v1234 = vunpack.c.l.b16 %v534
        %v1235 = vunpack.c.h.b16 %v534
        %v1236 = vunpack.c.l.b16 %v535
        %v1237 = vunpack.c.h.b16 %v535
        %v1238 = vunpack.c.l.b16 %v536
        %v1239 = vunpack.c.h.b16 %v536
        %v1240 = vunpack.c.l.b16 %v537
        %v1241 = vunpack.c.h.b16 %v537
        %v1242 = vunpack.c.l.b16 %v538
        %v1243 = vunpack.c.h.b16 %v538
        %v1244 = vunpack.c.l.b16 %v539
        %v1245 = vunpack.c.h.b16 %v539
        %v1246 = vunpack.c.l.b16 %v540
        %v1247 = vunpack.c.h.b16 %v540
        %v1248 = vunpack.c.l.b16 %v541
        %v1249 = vunpack.c.h.b16 %v541
        %v1250 = vunpack.c.l.b16 %v542
        %v1251 = vunpack.c.h.b16 %v542
        %v1252 = vunpack.c.l.b16 %v543
        %v1253 = vunpack.c.h.b16 %v543
        %v1254 = vunpack.c.l.b16 %v544
        %v1255 = vunpack.c.h.b16 %v544
        %v1256 = vunpack.c.l.b16 %v545
        %v1257 = vunpack.c.h.b16 %v545
        %v1258 = vunpack.c.l.b16 %v546
        %v1259 = vunpack.c.h.b16 %v546
        %v1260 = vunpack.c.l.b16 %v547
        %v1261 = vunpack.c.h.b16 %v547
        %v1262 = vunpack.c.l.b16 %v548
        %v1263 = vunpack.c.h.b16 %v548
        %v1264 = vunpack.c.l.b16 %v549
        %v1265 = vunpack.c.h.b16 %v549
        %v1266 = vunpack.c.l.b16 %v550
        %v1267 = vunpack.c.h.b16 %v550
        %v1268 = vunpack.c.l.b16 %v551
        %v1269 = vunpack.c.h.b16 %v551
        %v1270 = vunpack.c.l.b16 %v552
        %v1271 = vunpack.c.h.b16 %v552
        %v1272 = vunpack.c.l.b16 %v553
        %v1273 = vunpack.c.h.b16 %v553
        %v1274 = vunpack.c.l.b16 %v554
        %v1275 = vunpack.c.h.b16 %v554
        %v1276 = vunpack.c.l.b16 %v555
        %v1277 = vunpack.c.h.b16 %v555
        %v1278 = vunpack.c.l.b16 %v556
        %v1279 = vunpack.c.h.b16 %v556
        %v1280 = vunpack.c.l.b16 %v557
        %v1281 = vunpack.c.h.b16 %v557
        %v1282 = vunpack.c.l.b16 %v558
        %v1283 = vunpack.c.h.b16 %v558
        %v1284 = vunpack.c.l.b16 %v559
        %v1285 = vunpack.c.h.b16 %v559
        %v1286 = vunpack.c.l.b16 %v560
        %v1287 = vunpack.c.h.b16 %v560
        %v1288 = vunpack.c.l.b16 %v561
        %v1289 = vunpack.c.h.b16 %v561
        %v1290 = vunpack.c.l.b16 %v562
        %v1291 = vunpack.c.h.b16 %v562
        %v1292 = vunpack.c.l.b16 %v563
        %v1293 = vunpack.c.h.b16 %v563
        %v1294 = vunpack.c.l.b16 %v564
        %v1295 = vunpack.c.h.b16 %v564
        %v1296 = vunpack.c.l.b16 %v565
        %v1297 = vunpack.c.h.b16 %v565
        %v1298 = vunpack.c.l.b16 %v566
        %v1299 = vunpack.c.h.b16 %v566
        %v1300 = vunpack.c.l.b16 %v567
        %v1301 = vunpack.c.h.b16 %v567
        %v1302 = vunpack.c.l.b16 %v568
        %v1303 = vunpack.c.h.b16 %v568
        %v1304 = vunpack.c.l.b16 %v569
        %v1305 = vunpack.c.h.b16 %v569
        %v1306 = vunpack.c.l.b16 %v570
        %v1307 = vunpack.c.h.b16 %v570
        %v1308 = vunpack.c.l.b16 %v571
        %v1309 = vunpack.c.h.b16 %v571
        %v1310 = vunpack.c.l.b16 %v572
        %v1311 = vunpack.c.h.b16 %v572
        %v1312 = vunpack.c.l.b16 %v573
        %v1313 = vunpack.c.h.b16 %v573
        %v1314 = vunpack.c.l.b16 %v574
        %v1315 = vunpack.c.h.b16 %v574
        %v1316 = vunpack.c.l.b16 %v575
        %v1317 = vunpack.c.h.b16 %v575
        %v1318 = vunpack.c.l.b16 %v576
        %v1319 = vunpack.c.h.b16 %v576
        %v1320 = vunpack.c.l.b16 %v577
        %v1321 = vunpack.c.h.b16 %v577
        %v1322 = vunpack.c.l.b16 %v578
        %v1323 = vunpack.c.h.b16 %v578
        %v1324 = vunpack.c.l.b16 %v579
        %v1325 = vunpack.c.h.b16 %v579
        %v1326 = vunpack.c.l.b16 %v580
        %v1327 = vunpack.c.h.b16 %v580
        %v1328 = vunpack.c.l.b16 %v581
        %v1329 = vunpack.c.h.b16 %v581
        %v1330 = vunpack.c.l.b16 %v582
        %v1331 = vunpack.c.h.b16 %v582
        %v1332 = vunpack.c.l.b16 %v583
        %v1333 = vunpack.c.h.b16 %v583
        %v1334 = vunpack.c.l.b16 %v584
        %v1335 = vunpack.c.h.b16 %v584
        %v1336 = vunpack.c.l.b16 %v585
        %v1337 = vunpack.c.h.b16 %v585
        %v1338 = vunpack.c.l.b16 %v586
        %v1339 = vunpack.c.h.b16 %v586
        %v1340 = vunpack.c.l.b16 %v587
        %v1341 = vunpack.c.h.b16 %v587
        %v1342 = vunpack.c.l.b16 %v588
        %v1343 = vunpack.c.h.b16 %v588
        %v1344 = vunpack.c.l.b16 %v589
        %v1345 = vunpack.c.h.b16 %v589
        %v1346 = vunpack.c.l.b16 %v590
        %v1347 = vunpack.c.h.b16 %v590
        %v1348 = vunpack.c.l.b16 %v591
        %v1349 = vunpack.c.h.b16 %v591
        %v1350 = vunpack.c.l.b16 %v592
        %v1351 = vunpack.c.h.b16 %v592
        %v1352 = vunpack.c.l.b16 %v593
        %v1353 = vunpack.c.h.b16 %v593
        %v1354 = vunpack.c.l.b16 %v594
        %v1355 = vunpack.c.h.b16 %v594
        %v1356 = vunpack.c.l.b16 %v595
        %v1357 = vunpack.c.h.b16 %v595
        %v1358 = vunpack.c.l.b16 %v596
        %v1359 = vunpack.c.h.b16 %v596
        %v1360 = vunpack.c.l.b16 %v597
        %v1361 = vunpack.c.h.b16 %v597
        %v1362 = vunpack.c.l.b16 %v598
        %v1363 = vunpack.c.h.b16 %v598
        %v1364 = vunpack.c.l.b16 %v599
        %v1365 = vunpack.c.h.b16 %v599
        %v1366 = vunpack.c.l.b16 %v600
        %v1367 = vunpack.c.h.b16 %v600
        %v1368 = vunpack.c.l.b16 %v601
        %v1369 = vunpack.c.h.b16 %v601
        %v1370 = vunpack.c.l.b16 %v602
        %v1371 = vunpack.c.h.b16 %v602
        %v1372 = vunpack.c.l.b16 %v603
        %v1373 = vunpack.c.h.b16 %v603
        %v1374 = vunpack.c.l.b16 %v604
        %v1375 = vunpack.c.h.b16 %v604
        %v1376 = vunpack.c.l.b16 %v605
        %v1377 = vunpack.c.h.b16 %v605
        %v1378 = vunpack.c.l.b16 %v606
        %v1379 = vunpack.c.h.b16 %v606
        %v1380 = vunpack.c.l.b16 %v607
        %v1381 = vunpack.c.h.b16 %v607
        %v1382 = vunpack.c.l.b16 %v608
        %v1383 = vunpack.c.h.b16 %v608
        %v1384 = vunpack.c.l.b16 %v609
        %v1385 = vunpack.c.h.b16 %v609
        %v1386 = vunpack.c.l.b16 %v610
        %v1387 = vunpack.c.h.b16 %v610
        %v1388 = vunpack.c.l.b16 %v611
        %v1389 = vunpack.c.h.b16 %v611
        %v1390 = vunpack.c.l.b16 %v612
        %v1391 = vunpack.c.h.b16 %v612
        %v1392 = vunpack.c.l.b16 %v613
        %v1393 = vunpack.c.h.b16 %v613
        %v1394 = vunpack.c.l.b16 %v614
        %v1395 = vunpack.c.h.b16 %v614
        %v1396 = vunpack.c.l.b16 %v615
        %v1397 = vunpack.c.h.b16 %v615
        %v1398 = vunpack.c.l.b16 %v616
        %v1399 = vunpack.c.h.b16 %v616
        %v1400 = vunpack.c.l.b16 %v617
        %v1401 = vunpack.c.h.b16 %v617
        %v1402 = vunpack.c.l.b16 %v618
        %v1403 = vunpack.c.h.b16 %v618
        %v1404 = vunpack.c.l.b16 %v619
        %v1405 = vunpack.c.h.b16 %v619
        %v1406 = vunpack.c.l.b16 %v620
        %v1407 = vunpack.c.h.b16 %v620
        %v1408 = vunpack.c.l.b16 %v621
        %v1409 = vunpack.c.h.b16 %v621
        %v1410 = vunpack.c.l.b16 %v622
        %v1411 = vunpack.c.h.b16 %v622
        %v1412 = vunpack.c.l.b16 %v623
        %v1413 = vunpack.c.h.b16 %v623
        %v1414 = vpack.c.b16 %v906, %v902
        %v1415 = vpack.c.b16 %v907, %v903
        %v1416 = vpack.c.b16 %v908, %v904
        %v1417 = vpack.c.b16 %v909, %v905
        %v1418 = vpack.c.b16 %v914, %v910
        %v1419 = vpack.c.b16 %v915, %v911
        %v1420 = vpack.c.b16 %v916, %v912
        %v1421 = vpack.c.b16 %v917, %v913
        %v1422 = vpack.c.b16 %v922, %v918
        %v1423 = vpack.c.b16 %v923, %v919
        %v1424 = vpack.c.b16 %v924, %v920
        %v1425 = vpack.c.b16 %v925, %v921
        %v1426 = vpack.c.b16 %v930, %v926
        %v1427 = vpack.c.b16 %v931, %v927
        %v1428 = vpack.c.b16 %v932, %v928
        %v1429 = vpack.c.b16 %v933, %v929
        %v1430 = vpack.c.b16 %v938, %v934
        %v1431 = vpack.c.b16 %v939, %v935
        %v1432 = vpack.c.b16 %v940, %v936
        %v1433 = vpack.c.b16 %v941, %v937
        %v1434 = vpack.c.b16 %v946, %v942
        %v1435 = vpack.c.b16 %v947, %v943
        %v1436 = vpack.c.b16 %v948, %v944
        %v1437 = vpack.c.b16 %v949, %v945
        %v1438 = vpack.c.b16 %v954, %v950
        %v1439 = vpack.c.b16 %v955, %v951
        %v1440 = vpack.c.b16 %v956, %v952
        %v1441 = vpack.c.b16 %v957, %v953
        %v1442 = vpack.c.b16 %v962, %v958
        %v1443 = vpack.c.b16 %v963, %v959
        %v1444 = vpack.c.b16 %v964, %v960
        %v1445 = vpack.c.b16 %v965, %v961
        %v1446 = vpack.c.b16 %v970, %v966
        %v1447 = vpack.c.b16 %v971, %v967
        %v1448 = vpack.c.b16 %v972, %v968
        %v1449 = vpack.c.b16 %v973, %v969
        %v1450 = vpack.c.b16 %v978, %v974
        %v1451 = vpack.c.b16 %v979, %v975
        %v1452 = vpack.c.b16 %v980, %v976
        %v1453 = vpack.c.b16 %v981, %v977
        %v1454 = vpack.c.b16 %v986, %v982
        %v1455 = vpack.c.b16 %v987, %v983
        %v1456 = vpack.c.b16 %v988, %v984
        %v1457 = vpack.c.b16 %v989, %v985
        %v1458 = vpack.c.b16 %v994, %v990
        %v1459 = vpack.c.b16 %v995, %v991
        %v1460 = vpack.c.b16 %v996, %v992
        %v1461 = vpack.c.b16 %v997, %v993
        %v1462 = vpack.c.b16 %v1002, %v998
        %v1463 = vpack.c.b16 %v1003, %v999
        %v1464 = vpack.c.b16 %v1004, %v1000
        %v1465 = vpack.c.b16 %v1005, %v1001
        %v1466 = vpack.c.b16 %v1010, %v1006
        %v1467 = vpack.c.b16 %v1011, %v1007
        %v1468 = vpack.c.b16 %v1012, %v1008
        %v1469 = vpack.c.b16 %v1013, %v1009
        %v1470 = vpack.c.b16 %v1018, %v1014
        %v1471 = vpack.c.b16 %v1019, %v1015
        %v1472 = vpack.c.b16 %v1020, %v1016
        %v1473 = vpack.c.b16 %v1021, %v1017
        %v1474 = vpack.c.b16 %v1026, %v1022
        %v1475 = vpack.c.b16 %v1027, %v1023
        %v1476 = vpack.c.b16 %v1028, %v1024
        %v1477 = vpack.c.b16 %v1029, %v1025
        %v1478 = vpack.c.b16 %v1034, %v1030
        %v1479 = vpack.c.b16 %v1035, %v1031
        %v1480 = vpack.c.b16 %v1036, %v1032
        %v1481 = vpack.c.b16 %v1037, %v1033
        %v1482 = vpack.c.b16 %v1042, %v1038
        %v1483 = vpack.c.b16 %v1043, %v1039
        %v1484 = vpack.c.b16 %v1044, %v1040
        %v1485 = vpack.c.b16 %v1045, %v1041
        %v1486 = vpack.c.b16 %v1050, %v1046
        %v1487 = vpack.c.b16 %v1051, %v1047
        %v1488 = vpack.c.b16 %v1052, %v1048
        %v1489 = vpack.c.b16 %v1053, %v1049
        %v1490 = vpack.c.b16 %v1058, %v1054
        %v1491 = vpack.c.b16 %v1059, %v1055
        %v1492 = vpack.c.b16 %v1060, %v1056
        %v1493 = vpack.c.b16 %v1061, %v1057
        %v1494 = vpack.c.b16 %v1066, %v1062
        %v1495 = vpack.c.b16 %v1067, %v1063
        %v1496 = vpack.c.b16 %v1068, %v1064
        %v1497 = vpack.c.b16 %v1069, %v1065
        %v1498 = vpack.c.b16 %v1074, %v1070
        %v1499 = vpack.c.b16 %v1075, %v1071
        %v1500 = vpack.c.b16 %v1076, %v1072
        %v1501 = vpack.c.b16 %v1077, %v1073
        %v1502 = vpack.c.b16 %v1082, %v1078
        %v1503 = vpack.c.b16 %v1083, %v1079
        %v1504 = vpack.c.b16 %v1084, %v1080
        %v1505 = vpack.c.b16 %v1085, %v1081
        %v1506 = vpack.c.b16 %v1090, %v1086
        %v1507 = vpack.c.b16 %v1091, %v1087
        %v1508 = vpack.c.b16 %v1092, %v1088
        %v1509 = vpack.c.b16 %v1093, %v1089
        %v1510 = vpack.c.b16 %v1098, %v1094
        %v1511 = vpack.c.b16 %v1099, %v1095
        %v1512 = vpack.c.b16 %v1100, %v1096
        %v1513 = vpack.c.b16 %v1101, %v1097
        %v1514 = vpack.c.b16 %v1106, %v1102
        %v1515 = vpack.c.b16 %v1107, %v1103
        %v1516 = vpack.c.b16 %v1108, %v1104
        %v1517 = vpack.c.b16 %v1109, %v1105
        %v1518 = vpack.c.b16 %v1114, %v1110
        %v1519 = vpack.c.b16 %v1115, %v1111
        %v1520 = vpack.c.b16 %v1116, %v1112
        %v1521 = vpack.c.b16 %v1117, %v1113
        %v1522 = vpack.c.b16 %v1122, %v1118
        %v1523 = vpack.c.b16 %v1123, %v1119
        %v1524 = vpack.c.b16 %v1124, %v1120
        %v1525 = vpack.c.b16 %v1125, %v1121
        %v1526 = vpack.c.b16 %v1130, %v1126
        %v1527 = vpack.c.b16 %v1131, %v1127
        %v1528 = vpack.c.b16 %v1132, %v1128
        %v1529 = vpack.c.b16 %v1133, %v1129
        %v1530 = vpack.c.b16 %v1138, %v1134
        %v1531 = vpack.c.b16 %v1139, %v1135
        %v1532 = vpack.c.b16 %v1140, %v1136
        %v1533 = vpack.c.b16 %v1141, %v1137
        %v1534 = vpack.c.b16 %v1146, %v1142
        %v1535 = vpack.c.b16 %v1147, %v1143
        %v1536 = vpack.c.b16 %v1148, %v1144
        %v1537 = vpack.c.b16 %v1149, %v1145
        %v1538 = vpack.c.b16 %v1154, %v1150
        %v1539 = vpack.c.b16 %v1155, %v1151
        %v1540 = vpack.c.b16 %v1156, %v1152
        %v1541 = vpack.c.b16 %v1157, %v1153
        %v1542 = vpack.c.b16 %v1162, %v1158
        %v1543 = vpack.c.b16 %v1163, %v1159
        %v1544 = vpack.c.b16 %v1164, %v1160
        %v1545 = vpack.c.b16 %v1165, %v1161
        %v1546 = vpack.c.b16 %v1170, %v1166
        %v1547 = vpack.c.b16 %v1171, %v1167
        %v1548 = vpack.c.b16 %v1172, %v1168
        %v1549 = vpack.c.b16 %v1173, %v1169
        %v1550 = vpack.c.b16 %v1178, %v1174
        %v1551 = vpack.c.b16 %v1179, %v1175
        %v1552 = vpack.c.b16 %v1180, %v1176
        %v1553 = vpack.c.b16 %v1181, %v1177
        %v1554 = vpack.c.b16 %v1186, %v1182
        %v1555 = vpack.c.b16 %v1187, %v1183
        %v1556 = vpack.c.b16 %v1188, %v1184
        %v1557 = vpack.c.b16 %v1189, %v1185
        %v1558 = vpack.c.b16 %v1194, %v1190
        %v1559 = vpack.c.b16 %v1195, %v1191
        %v1560 = vpack.c.b16 %v1196, %v1192
        %v1561 = vpack.c.b16 %v1197, %v1193
        %v1562 = vpack.c.b16 %v1202, %v1198
        %v1563 = vpack.c.b16 %v1203, %v1199
        %v1564 = vpack.c.b16 %v1204, %v1200
        %v1565 = vpack.c.b16 %v1205, %v1201
        %v1566 = vpack.c.b16 %v1210, %v1206
        %v1567 = vpack.c.b16 %v1211, %v1207
        %v1568 = vpack.c.b16 %v1212, %v1208
        %v1569 = vpack.c.b16 %v1213, %v1209
        %v1570 = vpack.c.b16 %v1218, %v1214
        %v1571 = vpack.c.b16 %v1219, %v1215
        %v1572 = vpack.c.b16 %v1220, %v1216
        %v1573 = vpack.c.b16 %v1221, %v1217
        %v1574 = vpack.c.b16 %v1226, %v1222
        %v1575 = vpack.c.b16 %v1227, %v1223
        %v1576 = vpack.c.b16 %v1228, %v1224
        %v1577 = vpack.c.b16 %v1229, %v1225
        %v1578 = vpack.c.b16 %v1234, %v1230
        %v1579 = vpack.c.b16 %v1235, %v1231
        %v1580 = vpack.c.b16 %v1236, %v1232
        %v1581 = vpack.c.b16 %v1237, %v1233
        %v1582 = vpack.c.b16 %v1242, %v1238
        %v1583 = vpack.c.b16 %v1243, %v1239
        %v1584 = vpack.c.b16 %v1244, %v1240
        %v1585 = vpack.c.b16 %v1245, %v1241
        %v1586 = vpack.c.b16 %v1250, %v1246
        %v1587 = vpack.c.b16 %v1251, %v1247
        %v1588 = vpack.c.b16 %v1252, %v1248
        %v1589 = vpack.c.b16 %v1253, %v1249
        %v1590 = vpack.c.b16 %v1258, %v1254
        %v1591 = vpack.c.b16 %v1259, %v1255
        %v1592 = vpack.c.b16 %v1260, %v1256
        %v1593 = vpack.c.b16 %v1261, %v1257
        %v1594 = vpack.c.b16 %v1266, %v1262
        %v1595 = vpack.c.b16 %v1267, %v1263
        %v1596 = vpack.c.b16 %v1268, %v1264
        %v1597 = vpack.c.b16 %v1269, %v1265
        %v1598 = vpack.c.b16 %v1274, %v1270
        %v1599 = vpack.c.b16 %v1275, %v1271
        %v1600 = vpack.c.b16 %v1276, %v1272
        %v1601 = vpack.c.b16 %v1277, %v1273
        %v1602 = vpack.c.b16 %v1282, %v1278
        %v1603 = vpack.c.b16 %v1283, %v1279
        %v1604 = vpack.c.b16 %v1284, %v1280
        %v1605 = vpack.c.b16 %v1285, %v1281
        %v1606 = vpack.c.b16 %v1290, %v1286
        %v1607 = vpack.c.b16 %v1291, %v1287
        %v1608 = vpack.c.b16 %v1292, %v1288
        %v1609 = vpack.c.b16 %v1293, %v1289
        %v1610 = vpack.c.b16 %v1298, %v1294
        %v1611 = vpack.c.b16 %v1299, %v1295
        %v1612 = vpack.c.b16 %v1300, %v1296
        %v1613 = vpack.c.b16 %v1301, %v1297
        %v1614 = vpack.c.b16 %v1306, %v1302
        %v1615 = vpack.c.b16 %v1307, %v1303
        %v1616 = vpack.c.b16 %v1308, %v1304
        %v1617 = vpack.c.b16 %v1309, %v1305
        %v1618 = vpack.c.b16 %v1314, %v1310
        %v1619 = vpack.c.b16 %v1315, %v1311
        %v1620 = vpack.c.b16 %v1316, %v1312
        %v1621 = vpack.c.b16 %v1317, %v1313
        %v1622 = vpack.c.b16 %v1322, %v1318
        %v1623 = vpack.c.b16 %v1323, %v1319
        %v1624 = vpack.c.b16 %v1324, %v1320
        %v1625 = vpack.c.b16 %v1325, %v1321
        %v1626 = vpack.c.b16 %v1330, %v1326
        %v1627 = vpack.c.b16 %v1331, %v1327
        %v1628 = vpack.c.b16 %v1332, %v1328
        %v1629 = vpack.c.b16 %v1333, %v1329
        %v1630 = vpack.c.b16 %v1338, %v1334
        %v1631 = vpack.c.b16 %v1339, %v1335
        %v1632 = vpack.c.b16 %v1340, %v1336
        %v1633 = vpack.c.b16 %v1341, %v1337
        %v1634 = vpack.c.b16 %v1346, %v1342
        %v1635 = vpack.c.b16 %v1347, %v1343
        %v1636 = vpack.c.b16 %v1348, %v1344
        %v1637 = vpack.c.b16 %v1349, %v1345
        %v1638 = vpack.c.b16 %v1354, %v1350
        %v1639 = vpack.c.b16 %v1355, %v1351
        %v1640 = vpack.c.b16 %v1356, %v1352
        %v1641 = vpack.c.b16 %v1357, %v1353
        %v1642 = vpack.c.b16 %v1362, %v1358
        %v1643 = vpack.c.b16 %v1363, %v1359
        %v1644 = vpack.c.b16 %v1364, %v1360
        %v1645 = vpack.c.b16 %v1365, %v1361
        %v1646 = vpack.c.b16 %v1370, %v1366
        %v1647 = vpack.c.b16 %v1371, %v1367
        %v1648 = vpack.c.b16 %v1372, %v1368
        %v1649 = vpack.c.b16 %v1373, %v1369
        %v1650 = vpack.c.b16 %v1378, %v1374
        %v1651 = vpack.c.b16 %v1379, %v1375
        %v1652 = vpack.c.b16 %v1380, %v1376
        %v1653 = vpack.c.b16 %v1381, %v1377
        %v1654 = vpack.c.b16 %v1386, %v1382
        %v1655 = vpack.c.b16 %v1387, %v1383
        %v1656 = vpack.c.b16 %v1388, %v1384
        %v1657 = vpack.c.b16 %v1389, %v1385
        %v1658 = vpack.c.b16 %v1394, %v1390
        %v1659 = vpack.c.b16 %v1395, %v1391
        %v1660 = vpack.c.b16 %v1396, %v1392
        %v1661 = vpack.c.b16 %v1397, %v1393
        %v1662 = vpack.c.b16 %v1402, %v1398
        %v1663 = vpack.c.b16 %v1403, %v1399
        %v1664 = vpack.c.b16 %v1404, %v1400
        %v1665 = vpack.c.b16 %v1405, %v1401
        %v1666 = vpack.c.b16 %v1410, %v1406
        %v1667 = vpack.c.b16 %v1411, %v1407
        %v1668 = vpack.c.b16 %v1412, %v1408
        %v1669 = vpack.c.b16 %v1413, %v1409
        %1926 = vmatprep.subr.bf16.mxu0 %v1443
        %1927 = vmatpush1.bf16.msra.mxu0 %v1442
        %1928 = vmatprep.subr.bf16.mxu0 %v1439
        %1929 = vmatpush1.bf16.msra.mxu0 %v1438
        %1930 = vmatprep.subr.bf16.mxu0 %v1435
        %1931 = vmatpush1.bf16.msra.mxu0 %v1434
        %1932 = vmatprep.subr.bf16.mxu0 %v1431
        %1933 = vmatpush1.bf16.msra.mxu0 %v1430
        %1934 = vmatprep.subr.bf16.mxu0 %v1427
        %1935 = vmatpush1.bf16.msra.mxu0 %v1426
        %1936 = vmatprep.subr.bf16.mxu0 %v1423
        %1937 = vmatpush1.bf16.msra.mxu0 %v1422
        %1938 = vmatprep.subr.bf16.mxu0 %v1419
        %1939 = vmatpush1.bf16.msra.mxu0 %v1418
        %1940 = vmatprep.subr.bf16.mxu0 %v1415
        %1941 = vmatpush1.bf16.msra.mxu0 %v1414
        %1942 = vmatprep.subr.bf16.mxu0 %v1475
        %1943 = vmatpush2.bf16.msra.mxu0 %v1474
        %1944 = vmatprep.subr.bf16.mxu0 %v1471
        %1945 = vmatpush2.bf16.msra.mxu0 %v1470
        %1946 = vmatprep.subr.bf16.mxu0 %v1467
        %1947 = vmatpush2.bf16.msra.mxu0 %v1466
        %1948 = vmatprep.subr.bf16.mxu0 %v1463
        %1949 = vmatpush2.bf16.msra.mxu0 %v1462
        %1950 = vmatprep.subr.bf16.mxu0 %v1459
        %1951 = vmatpush2.bf16.msra.mxu0 %v1458
        %1952 = vmatprep.subr.bf16.mxu0 %v1455
        %1953 = vmatpush2.bf16.msra.mxu0 %v1454
        %1954 = vmatprep.subr.bf16.mxu0 %v1451
        %1955 = vmatpush2.bf16.msra.mxu0 %v1450
        %1956 = vmatprep.subr.bf16.mxu0 %v1447
        %1957 = vmatpush2.bf16.msra.mxu0 %v1446
        %1958 = vmatprep.mubr.bf16.mxu0 %v361
        %1959 = vmatmul.mubr.bf16.gmra.mxu0 %v360
        %v1960 = vpop.f32.mrf.mxu0
        %v1961 = vadd.f32 %v629, %v1960
        %v1962 = vpop.f32.mrf.mxu0
        %v1963 = vadd.f32 %v633, %v1962
        %v1964 = vpop.f32.mrf.mxu0
        %v1965 = vpop.f32.mrf.mxu0
        %1966 = vdwg.mxu0
        %1967 = vmatprep.subr.bf16.mxu0 %v1507
        %1968 = vmatpush1.bf16.msra.mxu0 %v1506
        %1969 = vmatprep.subr.bf16.mxu0 %v1503
        %1970 = vmatpush1.bf16.msra.mxu0 %v1502
        %1971 = vmatprep.subr.bf16.mxu0 %v1499
        %1972 = vmatpush1.bf16.msra.mxu0 %v1498
        %1973 = vmatprep.subr.bf16.mxu0 %v1495
        %1974 = vmatpush1.bf16.msra.mxu0 %v1494
        %1975 = vmatprep.subr.bf16.mxu0 %v1491
        %1976 = vmatpush1.bf16.msra.mxu0 %v1490
        %1977 = vmatprep.subr.bf16.mxu0 %v1487
        %1978 = vmatpush1.bf16.msra.mxu0 %v1486
        %1979 = vmatprep.subr.bf16.mxu0 %v1483
        %1980 = vmatpush1.bf16.msra.mxu0 %v1482
        %1981 = vmatprep.subr.bf16.mxu0 %v1479
        %1982 = vmatpush1.bf16.msra.mxu0 %v1478
        %1983 = vmatprep.subr.bf16.mxu0 %v1539
        %1984 = vmatpush2.bf16.msra.mxu0 %v1538
        %1985 = vmatprep.subr.bf16.mxu0 %v1535
        %1986 = vmatpush2.bf16.msra.mxu0 %v1534
        %1987 = vmatprep.subr.bf16.mxu0 %v1531
        %1988 = vmatpush2.bf16.msra.mxu0 %v1530
        %1989 = vmatprep.subr.bf16.mxu0 %v1527
        %1990 = vmatpush2.bf16.msra.mxu0 %v1526
        %1991 = vmatprep.subr.bf16.mxu0 %v1523
        %1992 = vmatpush2.bf16.msra.mxu0 %v1522
        %1993 = vmatprep.subr.bf16.mxu0 %v1519
        %1994 = vmatpush2.bf16.msra.mxu0 %v1518
        %1995 = vmatprep.subr.bf16.mxu0 %v1515
        %1996 = vmatpush2.bf16.msra.mxu0 %v1514
        %1997 = vmatprep.subr.bf16.mxu0 %v1511
        %1998 = vmatpush2.bf16.msra.mxu0 %v1510
        %1999 = vmatprep.mubr.bf16.mxu0 %v363
        %2000 = vmatmul.mubr.bf16.gmra.mxu0 %v362
        %v2001 = vpop.f32.mrf.mxu0
        %v2002 = vadd.f32 %v1961, %v2001
        %v2003 = vpop.f32.mrf.mxu0
        %v2004 = vadd.f32 %v1963, %v2003
        %v2005 = vpop.f32.mrf.mxu0
        %v2006 = vpop.f32.mrf.mxu0
        %2007 = vdwg.mxu0
        %2008 = vmatprep.subr.bf16.mxu0 %v1571
        %2009 = vmatpush1.bf16.msra.mxu0 %v1570
        %2010 = vmatprep.subr.bf16.mxu0 %v1567
        %2011 = vmatpush1.bf16.msra.mxu0 %v1566
        %2012 = vmatprep.subr.bf16.mxu0 %v1563
        %2013 = vmatpush1.bf16.msra.mxu0 %v1562
        %2014 = vmatprep.subr.bf16.mxu0 %v1559
        %2015 = vmatpush1.bf16.msra.mxu0 %v1558
        %2016 = vmatprep.subr.bf16.mxu0 %v1555
        %2017 = vmatpush1.bf16.msra.mxu0 %v1554
        %2018 = vmatprep.subr.bf16.mxu0 %v1551
        %2019 = vmatpush1.bf16.msra.mxu0 %v1550
        %2020 = vmatprep.subr.bf16.mxu0 %v1547
        %2021 = vmatpush1.bf16.msra.mxu0 %v1546
        %2022 = vmatprep.subr.bf16.mxu0 %v1543
        %2023 = vmatpush1.bf16.msra.mxu0 %v1542
        %2024 = vmatprep.subr.bf16.mxu0 %v1603
        %2025 = vmatpush2.bf16.msra.mxu0 %v1602
        %2026 = vmatprep.subr.bf16.mxu0 %v1599
        %2027 = vmatpush2.bf16.msra.mxu0 %v1598
        %2028 = vmatprep.subr.bf16.mxu0 %v1595
        %2029 = vmatpush2.bf16.msra.mxu0 %v1594
        %2030 = vmatprep.subr.bf16.mxu0 %v1591
        %2031 = vmatpush2.bf16.msra.mxu0 %v1590
        %2032 = vmatprep.subr.bf16.mxu0 %v1587
        %2033 = vmatpush2.bf16.msra.mxu0 %v1586
        %2034 = vmatprep.subr.bf16.mxu0 %v1583
        %2035 = vmatpush2.bf16.msra.mxu0 %v1582
        %2036 = vmatprep.subr.bf16.mxu0 %v1579
        %2037 = vmatpush2.bf16.msra.mxu0 %v1578
        %2038 = vmatprep.subr.bf16.mxu0 %v1575
        %2039 = vmatpush2.bf16.msra.mxu0 %v1574
        %2040 = vmatprep.mubr.bf16.mxu0 %v365
        %2041 = vmatmul.mubr.bf16.gmra.mxu0 %v364
        %v2042 = vpop.f32.mrf.mxu0
        %v2043 = vadd.f32 %v2002, %v2042
        %v2044 = vpop.f32.mrf.mxu0
        %v2045 = vadd.f32 %v2004, %v2044
        %v2046 = vpop.f32.mrf.mxu0
        %v2047 = vpop.f32.mrf.mxu0
        %2048 = vdwg.mxu0
        %2049 = vmatprep.subr.bf16.mxu0 %v1635
        %2050 = vmatpush1.bf16.msra.mxu0 %v1634
        %2051 = vmatprep.subr.bf16.mxu0 %v1631
        %2052 = vmatpush1.bf16.msra.mxu0 %v1630
        %2053 = vmatprep.subr.bf16.mxu0 %v1627
        %2054 = vmatpush1.bf16.msra.mxu0 %v1626
        %2055 = vmatprep.subr.bf16.mxu0 %v1623
        %2056 = vmatpush1.bf16.msra.mxu0 %v1622
        %2057 = vmatprep.subr.bf16.mxu0 %v1619
        %2058 = vmatpush1.bf16.msra.mxu0 %v1618
        %2059 = vmatprep.subr.bf16.mxu0 %v1615
        %2060 = vmatpush1.bf16.msra.mxu0 %v1614
        %2061 = vmatprep.subr.bf16.mxu0 %v1611
        %2062 = vmatpush1.bf16.msra.mxu0 %v1610
        %2063 = vmatprep.subr.bf16.mxu0 %v1607
        %2064 = vmatpush1.bf16.msra.mxu0 %v1606
        %2065 = vmatprep.subr.bf16.mxu0 %v1667
        %2066 = vmatpush2.bf16.msra.mxu0 %v1666
        %2067 = vmatprep.subr.bf16.mxu0 %v1663
        %2068 = vmatpush2.bf16.msra.mxu0 %v1662
        %2069 = vmatprep.subr.bf16.mxu0 %v1659
        %2070 = vmatpush2.bf16.msra.mxu0 %v1658
        %2071 = vmatprep.subr.bf16.mxu0 %v1655
        %2072 = vmatpush2.bf16.msra.mxu0 %v1654
        %2073 = vmatprep.subr.bf16.mxu0 %v1651
        %2074 = vmatpush2.bf16.msra.mxu0 %v1650
        %2075 = vmatprep.subr.bf16.mxu0 %v1647
        %2076 = vmatpush2.bf16.msra.mxu0 %v1646
        %2077 = vmatprep.subr.bf16.mxu0 %v1643
        %2078 = vmatpush2.bf16.msra.mxu0 %v1642
        %2079 = vmatprep.subr.bf16.mxu0 %v1639
        %2080 = vmatpush2.bf16.msra.mxu0 %v1638
        %2081 = vmatprep.mubr.bf16.mxu0 %v367
        %2082 = vmatmul.mubr.bf16.gmra.mxu0 %v366
        %v2083 = vpop.f32.mrf.mxu0
        %v2084 = vadd.f32 %v2043, %v2083
        %v2085 = vpop.f32.mrf.mxu0
        %v2086 = vadd.f32 %v2045, %v2085
        %v2087 = vpop.f32.mrf.mxu0
        %v2088 = vpop.f32.mrf.mxu0
        %2089 = vdwg.mxu0
        %2090 = vmatprep.subr.bf16.mxu0 %v1445
        %2091 = vmatpush1.bf16.msra.mxu0 %v1444
        %2092 = vmatprep.subr.bf16.mxu0 %v1441
        %2093 = vmatpush1.bf16.msra.mxu0 %v1440
        %2094 = vmatprep.subr.bf16.mxu0 %v1437
        %2095 = vmatpush1.bf16.msra.mxu0 %v1436
        %2096 = vmatprep.subr.bf16.mxu0 %v1433
        %2097 = vmatpush1.bf16.msra.mxu0 %v1432
        %2098 = vmatprep.subr.bf16.mxu0 %v1429
        %2099 = vmatpush1.bf16.msra.mxu0 %v1428
        %2100 = vmatprep.subr.bf16.mxu0 %v1425
        %2101 = vmatpush1.bf16.msra.mxu0 %v1424
        %2102 = vmatprep.subr.bf16.mxu0 %v1421
        %2103 = vmatpush1.bf16.msra.mxu0 %v1420
        %2104 = vmatprep.subr.bf16.mxu0 %v1417
        %2105 = vmatpush1.bf16.msra.mxu0 %v1416
        %2106 = vmatprep.subr.bf16.mxu0 %v1477
        %2107 = vmatpush2.bf16.msra.mxu0 %v1476
        %2108 = vmatprep.subr.bf16.mxu0 %v1473
        %2109 = vmatpush2.bf16.msra.mxu0 %v1472
        %2110 = vmatprep.subr.bf16.mxu0 %v1469
        %2111 = vmatpush2.bf16.msra.mxu0 %v1468
        %2112 = vmatprep.subr.bf16.mxu0 %v1465
        %2113 = vmatpush2.bf16.msra.mxu0 %v1464
        %2114 = vmatprep.subr.bf16.mxu0 %v1461
        %2115 = vmatpush2.bf16.msra.mxu0 %v1460
        %2116 = vmatprep.subr.bf16.mxu0 %v1457
        %2117 = vmatpush2.bf16.msra.mxu0 %v1456
        %2118 = vmatprep.subr.bf16.mxu0 %v1453
        %2119 = vmatpush2.bf16.msra.mxu0 %v1452
        %2120 = vmatprep.subr.bf16.mxu0 %v1449
        %2121 = vmatpush2.bf16.msra.mxu0 %v1448
        %2122 = vmatprep.mubr.bf16.mxu0 %v361
        %2123 = vmatmul.mubr.bf16.gmra.mxu0 %v360
        %v2124 = vpop.f32.mrf.mxu0
        %v2125 = vadd.f32 %v637, %v2124
        %v2126 = vpop.f32.mrf.mxu0
        %v2127 = vadd.f32 %v641, %v2126
        %v2128 = vpop.f32.mrf.mxu0
        %v2129 = vpop.f32.mrf.mxu0
        %2130 = vdwg.mxu0
        %2131 = vmatprep.subr.bf16.mxu0 %v1509
        %2132 = vmatpush1.bf16.msra.mxu0 %v1508
        %2133 = vmatprep.subr.bf16.mxu0 %v1505
        %2134 = vmatpush1.bf16.msra.mxu0 %v1504
        %2135 = vmatprep.subr.bf16.mxu0 %v1501
        %2136 = vmatpush1.bf16.msra.mxu0 %v1500
        %2137 = vmatprep.subr.bf16.mxu0 %v1497
        %2138 = vmatpush1.bf16.msra.mxu0 %v1496
        %2139 = vmatprep.subr.bf16.mxu0 %v1493
        %2140 = vmatpush1.bf16.msra.mxu0 %v1492
        %2141 = vmatprep.subr.bf16.mxu0 %v1489
        %2142 = vmatpush1.bf16.msra.mxu0 %v1488
        %2143 = vmatprep.subr.bf16.mxu0 %v1485
        %2144 = vmatpush1.bf16.msra.mxu0 %v1484
        %2145 = vmatprep.subr.bf16.mxu0 %v1481
        %2146 = vmatpush1.bf16.msra.mxu0 %v1480
        %2147 = vmatprep.subr.bf16.mxu0 %v1541
        %2148 = vmatpush2.bf16.msra.mxu0 %v1540
        %2149 = vmatprep.subr.bf16.mxu0 %v1537
        %2150 = vmatpush2.bf16.msra.mxu0 %v1536
        %2151 = vmatprep.subr.bf16.mxu0 %v1533
        %2152 = vmatpush2.bf16.msra.mxu0 %v1532
        %2153 = vmatprep.subr.bf16.mxu0 %v1529
        %2154 = vmatpush2.bf16.msra.mxu0 %v1528
        %2155 = vmatprep.subr.bf16.mxu0 %v1525
        %2156 = vmatpush2.bf16.msra.mxu0 %v1524
        %2157 = vmatprep.subr.bf16.mxu0 %v1521
        %2158 = vmatpush2.bf16.msra.mxu0 %v1520
        %2159 = vmatprep.subr.bf16.mxu0 %v1517
        %2160 = vmatpush2.bf16.msra.mxu0 %v1516
        %2161 = vmatprep.subr.bf16.mxu0 %v1513
        %2162 = vmatpush2.bf16.msra.mxu0 %v1512
        %2163 = vmatprep.mubr.bf16.mxu0 %v363
        %2164 = vmatmul.mubr.bf16.gmra.mxu0 %v362
        %v2165 = vpop.f32.mrf.mxu0
        %v2166 = vadd.f32 %v2125, %v2165
        %v2167 = vpop.f32.mrf.mxu0
        %v2168 = vadd.f32 %v2127, %v2167
        %v2169 = vpop.f32.mrf.mxu0
        %v2170 = vpop.f32.mrf.mxu0
        %2171 = vdwg.mxu0
        %2172 = vmatprep.subr.bf16.mxu0 %v1573
        %2173 = vmatpush1.bf16.msra.mxu0 %v1572
        %2174 = vmatprep.subr.bf16.mxu0 %v1569
        %2175 = vmatpush1.bf16.msra.mxu0 %v1568
        %2176 = vmatprep.subr.bf16.mxu0 %v1565
        %2177 = vmatpush1.bf16.msra.mxu0 %v1564
        %2178 = vmatprep.subr.bf16.mxu0 %v1561
        %2179 = vmatpush1.bf16.msra.mxu0 %v1560
        %2180 = vmatprep.subr.bf16.mxu0 %v1557
        %2181 = vmatpush1.bf16.msra.mxu0 %v1556
        %2182 = vmatprep.subr.bf16.mxu0 %v1553
        %2183 = vmatpush1.bf16.msra.mxu0 %v1552
        %2184 = vmatprep.subr.bf16.mxu0 %v1549
        %2185 = vmatpush1.bf16.msra.mxu0 %v1548
        %2186 = vmatprep.subr.bf16.mxu0 %v1545
        %2187 = vmatpush1.bf16.msra.mxu0 %v1544
        %2188 = vmatprep.subr.bf16.mxu0 %v1605
        %2189 = vmatpush2.bf16.msra.mxu0 %v1604
        %2190 = vmatprep.subr.bf16.mxu0 %v1601
        %2191 = vmatpush2.bf16.msra.mxu0 %v1600
        %2192 = vmatprep.subr.bf16.mxu0 %v1597
        %2193 = vmatpush2.bf16.msra.mxu0 %v1596
        %2194 = vmatprep.subr.bf16.mxu0 %v1593
        %2195 = vmatpush2.bf16.msra.mxu0 %v1592
        %2196 = vmatprep.subr.bf16.mxu0 %v1589
        %2197 = vmatpush2.bf16.msra.mxu0 %v1588
        %2198 = vmatprep.subr.bf16.mxu0 %v1585
        %2199 = vmatpush2.bf16.msra.mxu0 %v1584
        %2200 = vmatprep.subr.bf16.mxu0 %v1581
        %2201 = vmatpush2.bf16.msra.mxu0 %v1580
        %2202 = vmatprep.subr.bf16.mxu0 %v1577
        %2203 = vmatpush2.bf16.msra.mxu0 %v1576
        %2204 = vmatprep.mubr.bf16.mxu0 %v365
        %2205 = vmatmul.mubr.bf16.gmra.mxu0 %v364
        %v2206 = vpop.f32.mrf.mxu0
        %v2207 = vadd.f32 %v2166, %v2206
        %v2208 = vpop.f32.mrf.mxu0
        %v2209 = vadd.f32 %v2168, %v2208
        %v2210 = vpop.f32.mrf.mxu0
        %v2211 = vpop.f32.mrf.mxu0
        %2212 = vdwg.mxu0
        %2213 = vmatprep.subr.bf16.mxu0 %v1637
        %2214 = vmatpush1.bf16.msra.mxu0 %v1636
        %2215 = vmatprep.subr.bf16.mxu0 %v1633
        %2216 = vmatpush1.bf16.msra.mxu0 %v1632
        %2217 = vmatprep.subr.bf16.mxu0 %v1629
        %2218 = vmatpush1.bf16.msra.mxu0 %v1628
        %2219 = vmatprep.subr.bf16.mxu0 %v1625
        %2220 = vmatpush1.bf16.msra.mxu0 %v1624
        %2221 = vmatprep.subr.bf16.mxu0 %v1621
        %2222 = vmatpush1.bf16.msra.mxu0 %v1620
        %2223 = vmatprep.subr.bf16.mxu0 %v1617
        %2224 = vmatpush1.bf16.msra.mxu0 %v1616
        %2225 = vmatprep.subr.bf16.mxu0 %v1613
        %2226 = vmatpush1.bf16.msra.mxu0 %v1612
        %2227 = vmatprep.subr.bf16.mxu0 %v1609
        %2228 = vmatpush1.bf16.msra.mxu0 %v1608
        %2229 = vmatprep.subr.bf16.mxu0 %v1669
        %2230 = vmatpush2.bf16.msra.mxu0 %v1668
        %2231 = vmatprep.subr.bf16.mxu0 %v1665
        %2232 = vmatpush2.bf16.msra.mxu0 %v1664
        %2233 = vmatprep.subr.bf16.mxu0 %v1661
        %2234 = vmatpush2.bf16.msra.mxu0 %v1660
        %2235 = vmatprep.subr.bf16.mxu0 %v1657
        %2236 = vmatpush2.bf16.msra.mxu0 %v1656
        %2237 = vmatprep.subr.bf16.mxu0 %v1653
        %2238 = vmatpush2.bf16.msra.mxu0 %v1652
        %2239 = vmatprep.subr.bf16.mxu0 %v1649
        %2240 = vmatpush2.bf16.msra.mxu0 %v1648
        %2241 = vmatprep.subr.bf16.mxu0 %v1645
        %2242 = vmatpush2.bf16.msra.mxu0 %v1644
        %2243 = vmatprep.subr.bf16.mxu0 %v1641
        %2244 = vmatpush2.bf16.msra.mxu0 %v1640
        %2245 = vmatprep.mubr.bf16.mxu0 %v367
        %2246 = vmatmul.mubr.bf16.gmra.mxu0 %v366
        %v2247 = vpop.f32.mrf.mxu0
        %v2248 = vadd.f32 %v2207, %v2247
        %v2249 = vpop.f32.mrf.mxu0
        %v2250 = vadd.f32 %v2209, %v2249
        %v2251 = vpop.f32.mrf.mxu0
        %v2252 = vpop.f32.mrf.mxu0
        %2253 = vdwg.mxu0
        %v2254 = vsub.f32 0.0, %v2084
        %v2255 = vsub.f32 0.0, %v2086
        %v2256 = vsub.f32 0.0, %v2248
        %v2257 = vsub.f32 0.0, %v2250
        %v2258 = vmul.f32 %v2254, 1.442695
        %v2259 = vpow.pop %v2258
        %v2260 = vmul.f32 %v2255, 1.442695
        %v2261 = vpow.pop %v2260
        %v2262 = vmul.f32 %v2256, 1.442695
        %v2263 = vpow.pop %v2262
        %v2264 = vmul.f32 %v2257, 1.442695
        %v2265 = vpow.pop %v2264
        %v2266 = vadd.f32 %v2259, 1.0
        %v2267 = vadd.f32 %v2261, 1.0
        %v2268 = vadd.f32 %v2263, 1.0
        %v2269 = vadd.f32 %v2265, 1.0
        %v2270 = vrcp.pop %v2266
        %v2271 = vmul.f32 1.0, %v2270
        %v2272 = vrcp.pop %v2267
        %v2273 = vmul.f32 1.0, %v2272
        %v2274 = vrcp.pop %v2268
        %v2275 = vmul.f32 1.0, %v2274
        %v2276 = vrcp.pop %v2269
        %v2277 = vmul.f32 1.0, %v2276
        %v2278 = vpack.c.bf16 %v2271, %v2271
        %v2279 = vpack.c.bf16 %v2273, %v2273
        %v2280 = vpack.c.bf16 %v2275, %v2275
        %v2281 = vpack.c.bf16 %v2277, %v2277
        %v2282 = vld [vmem:[#allocation8] sm:$0xff]
        %v2283 = vld [vmem:[#allocation8 + $0x8] sm:$0xff]
        %v2284 = vld [vmem:[#allocation8 + $0x10] sm:$0xff]
        %v2285 = vld [vmem:[#allocation8 + $0x18] sm:$0xff]
        %v2286 = vld [vmem:[#allocation8 + $0x20] sm:$0xff]
        %v2287 = vld [vmem:[#allocation8 + $0x28] sm:$0xff]
        %v2288 = vld [vmem:[#allocation8 + $0x30] sm:$0xff]
        %v2289 = vld [vmem:[#allocation8 + $0x38] sm:$0xff]
        %v2290 = vld [vmem:[#allocation8 + $0x40] sm:$0xff]
        %v2291 = vld [vmem:[#allocation8 + $0x48] sm:$0xff]
        %v2292 = vld [vmem:[#allocation8 + $0x50] sm:$0xff]
        %v2293 = vld [vmem:[#allocation8 + $0x58] sm:$0xff]
        %v2294 = vld [vmem:[#allocation8 + $0x60] sm:$0xff]
        %v2295 = vld [vmem:[#allocation8 + $0x68] sm:$0xff]
        %v2296 = vld [vmem:[#allocation8 + $0x70] sm:$0xff]
        %v2297 = vld [vmem:[#allocation8 + $0x78] sm:$0xff]
        %v2298 = vld [vmem:[#allocation8 + $0x80] sm:$0xff]
        %v2299 = vld [vmem:[#allocation8 + $0x88] sm:$0xff]
        %v2300 = vld [vmem:[#allocation8 + $0x90] sm:$0xff]
        %v2301 = vld [vmem:[#allocation8 + $0x98] sm:$0xff]
        %v2302 = vld [vmem:[#allocation8 + $0xa0] sm:$0xff]
        %v2303 = vld [vmem:[#allocation8 + $0xa8] sm:$0xff]
        %v2304 = vld [vmem:[#allocation8 + $0xb0] sm:$0xff]
        %v2305 = vld [vmem:[#allocation8 + $0xb8] sm:$0xff]
        %v2306 = vld [vmem:[#allocation8 + $0xc0] sm:$0xff]
        %v2307 = vld [vmem:[#allocation8 + $0xc8] sm:$0xff]
        %v2308 = vld [vmem:[#allocation8 + $0xd0] sm:$0xff]
        %v2309 = vld [vmem:[#allocation8 + $0xd8] sm:$0xff]
        %v2310 = vld [vmem:[#allocation8 + $0xe0] sm:$0xff]
        %v2311 = vld [vmem:[#allocation8 + $0xe8] sm:$0xff]
        %v2312 = vld [vmem:[#allocation8 + $0xf0] sm:$0xff]
        %v2313 = vld [vmem:[#allocation8 + $0xf8] sm:$0xff]
        %v2314 = vld [vmem:[#allocation8 + $0x100] sm:$0xff]
        %v2315 = vld [vmem:[#allocation8 + $0x108] sm:$0xff]
        %v2316 = vld [vmem:[#allocation8 + $0x110] sm:$0xff]
        %v2317 = vld [vmem:[#allocation8 + $0x118] sm:$0xff]
        %v2318 = vld [vmem:[#allocation8 + $0x120] sm:$0xff]
        %v2319 = vld [vmem:[#allocation8 + $0x128] sm:$0xff]
        %v2320 = vld [vmem:[#allocation8 + $0x130] sm:$0xff]
        %v2321 = vld [vmem:[#allocation8 + $0x138] sm:$0xff]
        %v2322 = vld [vmem:[#allocation8 + $0x140] sm:$0xff]
        %v2323 = vld [vmem:[#allocation8 + $0x148] sm:$0xff]
        %v2324 = vld [vmem:[#allocation8 + $0x150] sm:$0xff]
        %v2325 = vld [vmem:[#allocation8 + $0x158] sm:$0xff]
        %v2326 = vld [vmem:[#allocation8 + $0x160] sm:$0xff]
        %v2327 = vld [vmem:[#allocation8 + $0x168] sm:$0xff]
        %v2328 = vld [vmem:[#allocation8 + $0x170] sm:$0xff]
        %v2329 = vld [vmem:[#allocation8 + $0x178] sm:$0xff]
        %v2330 = vld [vmem:[#allocation8 + $0x180] sm:$0xff]
        %v2331 = vld [vmem:[#allocation8 + $0x188] sm:$0xff]
        %v2332 = vld [vmem:[#allocation8 + $0x190] sm:$0xff]
        %v2333 = vld [vmem:[#allocation8 + $0x198] sm:$0xff]
        %v2334 = vld [vmem:[#allocation8 + $0x1a0] sm:$0xff]
        %v2335 = vld [vmem:[#allocation8 + $0x1a8] sm:$0xff]
        %v2336 = vld [vmem:[#allocation8 + $0x1b0] sm:$0xff]
        %v2337 = vld [vmem:[#allocation8 + $0x1b8] sm:$0xff]
        %v2338 = vld [vmem:[#allocation8 + $0x1c0] sm:$0xff]
        %v2339 = vld [vmem:[#allocation8 + $0x1c8] sm:$0xff]
        %v2340 = vld [vmem:[#allocation8 + $0x1d0] sm:$0xff]
        %v2341 = vld [vmem:[#allocation8 + $0x1d8] sm:$0xff]
        %v2342 = vld [vmem:[#allocation8 + $0x1e0] sm:$0xff]
        %v2343 = vld [vmem:[#allocation8 + $0x1e8] sm:$0xff]
        %v2344 = vld [vmem:[#allocation8 + $0x1f0] sm:$0xff]
        %v2345 = vld [vmem:[#allocation8 + $0x1f8] sm:$0xff]
        %v2346 = vld [vmem:[#allocation8 + $0x200] sm:$0xff]
        %v2347 = vld [vmem:[#allocation8 + $0x208] sm:$0xff]
        %v2348 = vld [vmem:[#allocation8 + $0x210] sm:$0xff]
        %v2349 = vld [vmem:[#allocation8 + $0x218] sm:$0xff]
        %v2350 = vld [vmem:[#allocation8 + $0x220] sm:$0xff]
        %v2351 = vld [vmem:[#allocation8 + $0x228] sm:$0xff]
        %v2352 = vld [vmem:[#allocation8 + $0x230] sm:$0xff]
        %v2353 = vld [vmem:[#allocation8 + $0x238] sm:$0xff]
        %v2354 = vld [vmem:[#allocation8 + $0x240] sm:$0xff]
        %v2355 = vld [vmem:[#allocation8 + $0x248] sm:$0xff]
        %v2356 = vld [vmem:[#allocation8 + $0x250] sm:$0xff]
        %v2357 = vld [vmem:[#allocation8 + $0x258] sm:$0xff]
        %v2358 = vld [vmem:[#allocation8 + $0x260] sm:$0xff]
        %v2359 = vld [vmem:[#allocation8 + $0x268] sm:$0xff]
        %v2360 = vld [vmem:[#allocation8 + $0x270] sm:$0xff]
        %v2361 = vld [vmem:[#allocation8 + $0x278] sm:$0xff]
        %v2362 = vld [vmem:[#allocation8 + $0x280] sm:$0xff]
        %v2363 = vld [vmem:[#allocation8 + $0x288] sm:$0xff]
        %v2364 = vld [vmem:[#allocation8 + $0x290] sm:$0xff]
        %v2365 = vld [vmem:[#allocation8 + $0x298] sm:$0xff]
        %v2366 = vld [vmem:[#allocation8 + $0x2a0] sm:$0xff]
        %v2367 = vld [vmem:[#allocation8 + $0x2a8] sm:$0xff]
        %v2368 = vld [vmem:[#allocation8 + $0x2b0] sm:$0xff]
        %v2369 = vld [vmem:[#allocation8 + $0x2b8] sm:$0xff]
        %v2370 = vld [vmem:[#allocation8 + $0x2c0] sm:$0xff]
        %v2371 = vld [vmem:[#allocation8 + $0x2c8] sm:$0xff]
        %v2372 = vld [vmem:[#allocation8 + $0x2d0] sm:$0xff]
        %v2373 = vld [vmem:[#allocation8 + $0x2d8] sm:$0xff]
        %v2374 = vld [vmem:[#allocation8 + $0x2e0] sm:$0xff]
        %v2375 = vld [vmem:[#allocation8 + $0x2e8] sm:$0xff]
        %v2376 = vld [vmem:[#allocation8 + $0x2f0] sm:$0xff]
        %v2377 = vld [vmem:[#allocation8 + $0x2f8] sm:$0xff]
        %v2378 = vld [vmem:[#allocation8 + $0x300] sm:$0xff]
        %v2379 = vld [vmem:[#allocation8 + $0x308] sm:$0xff]
        %v2380 = vld [vmem:[#allocation8 + $0x310] sm:$0xff]
        %v2381 = vld [vmem:[#allocation8 + $0x318] sm:$0xff]
        %v2382 = vld [vmem:[#allocation8 + $0x320] sm:$0xff]
        %v2383 = vld [vmem:[#allocation8 + $0x328] sm:$0xff]
        %v2384 = vld [vmem:[#allocation8 + $0x330] sm:$0xff]
        %v2385 = vld [vmem:[#allocation8 + $0x338] sm:$0xff]
        %v2386 = vld [vmem:[#allocation8 + $0x340] sm:$0xff]
        %v2387 = vld [vmem:[#allocation8 + $0x348] sm:$0xff]
        %v2388 = vld [vmem:[#allocation8 + $0x350] sm:$0xff]
        %v2389 = vld [vmem:[#allocation8 + $0x358] sm:$0xff]
        %v2390 = vld [vmem:[#allocation8 + $0x360] sm:$0xff]
        %v2391 = vld [vmem:[#allocation8 + $0x368] sm:$0xff]
        %v2392 = vld [vmem:[#allocation8 + $0x370] sm:$0xff]
        %v2393 = vld [vmem:[#allocation8 + $0x378] sm:$0xff]
        %v2394 = vld [vmem:[#allocation8 + $0x380] sm:$0xff]
        %v2395 = vld [vmem:[#allocation8 + $0x388] sm:$0xff]
        %v2396 = vld [vmem:[#allocation8 + $0x390] sm:$0xff]
        %v2397 = vld [vmem:[#allocation8 + $0x398] sm:$0xff]
        %v2398 = vld [vmem:[#allocation8 + $0x3a0] sm:$0xff]
        %v2399 = vld [vmem:[#allocation8 + $0x3a8] sm:$0xff]
        %v2400 = vld [vmem:[#allocation8 + $0x3b0] sm:$0xff]
        %v2401 = vld [vmem:[#allocation8 + $0x3b8] sm:$0xff]
        %v2402 = vld [vmem:[#allocation8 + $0x3c0] sm:$0xff]
        %v2403 = vld [vmem:[#allocation8 + $0x3c8] sm:$0xff]
        %v2404 = vld [vmem:[#allocation8 + $0x3d0] sm:$0xff]
        %v2405 = vld [vmem:[#allocation8 + $0x3d8] sm:$0xff]
        %v2406 = vld [vmem:[#allocation8 + $0x3e0] sm:$0xff]
        %v2407 = vld [vmem:[#allocation8 + $0x3e8] sm:$0xff]
        %v2408 = vld [vmem:[#allocation8 + $0x3f0] sm:$0xff]
        %v2409 = vld [vmem:[#allocation8 + $0x3f8] sm:$0xff]
        %v2410 = vld [vmem:[%s4] sm:$0xf]
        %v2412 = vlaneseq
        %v2413 = vshrl.u32 %v2412, 7
        %v2414 = vsub.s32 0, %v2413
        %v2415 = vrot.slane %v2410, %v2414
        %v2416 = vlaneseq
        %v2417 = vshrl.u32 %v2416, 7
        %v2418 = vsub.s32 1, %v2417
        %v2419 = vrot.slane %v2410, %v2418
        %v2420 = vlaneseq
        %v2421 = vshrl.u32 %v2420, 7
        %v2422 = vsub.s32 2, %v2421
        %v2423 = vrot.slane %v2410, %v2422
        %v2424 = vlaneseq
        %v2425 = vshrl.u32 %v2424, 7
        %v2426 = vsub.s32 3, %v2425
        %v2427 = vrot.slane %v2410, %v2426
        %v2560 = vunpack.c.l.b16 %v2282
        %v2561 = vunpack.c.h.b16 %v2282
        %v2562 = vunpack.c.l.b16 %v2283
        %v2563 = vunpack.c.h.b16 %v2283
        %v2564 = vunpack.c.l.b16 %v2284
        %v2565 = vunpack.c.h.b16 %v2284
        %v2566 = vunpack.c.l.b16 %v2285
        %v2567 = vunpack.c.h.b16 %v2285
        %v2568 = vunpack.c.l.b16 %v2286
        %v2569 = vunpack.c.h.b16 %v2286
        %v2570 = vunpack.c.l.b16 %v2287
        %v2571 = vunpack.c.h.b16 %v2287
        %v2572 = vunpack.c.l.b16 %v2288
        %v2573 = vunpack.c.h.b16 %v2288
        %v2574 = vunpack.c.l.b16 %v2289
        %v2575 = vunpack.c.h.b16 %v2289
        %v2576 = vunpack.c.l.b16 %v2290
        %v2577 = vunpack.c.h.b16 %v2290
        %v2578 = vunpack.c.l.b16 %v2291
        %v2579 = vunpack.c.h.b16 %v2291
        %v2580 = vunpack.c.l.b16 %v2292
        %v2581 = vunpack.c.h.b16 %v2292
        %v2582 = vunpack.c.l.b16 %v2293
        %v2583 = vunpack.c.h.b16 %v2293
        %v2584 = vunpack.c.l.b16 %v2294
        %v2585 = vunpack.c.h.b16 %v2294
        %v2586 = vunpack.c.l.b16 %v2295
        %v2587 = vunpack.c.h.b16 %v2295
        %v2588 = vunpack.c.l.b16 %v2296
        %v2589 = vunpack.c.h.b16 %v2296
        %v2590 = vunpack.c.l.b16 %v2297
        %v2591 = vunpack.c.h.b16 %v2297
        %v2592 = vunpack.c.l.b16 %v2298
        %v2593 = vunpack.c.h.b16 %v2298
        %v2594 = vunpack.c.l.b16 %v2299
        %v2595 = vunpack.c.h.b16 %v2299
        %v2596 = vunpack.c.l.b16 %v2300
        %v2597 = vunpack.c.h.b16 %v2300
        %v2598 = vunpack.c.l.b16 %v2301
        %v2599 = vunpack.c.h.b16 %v2301
        %v2600 = vunpack.c.l.b16 %v2302
        %v2601 = vunpack.c.h.b16 %v2302
        %v2602 = vunpack.c.l.b16 %v2303
        %v2603 = vunpack.c.h.b16 %v2303
        %v2604 = vunpack.c.l.b16 %v2304
        %v2605 = vunpack.c.h.b16 %v2304
        %v2606 = vunpack.c.l.b16 %v2305
        %v2607 = vunpack.c.h.b16 %v2305
        %v2608 = vunpack.c.l.b16 %v2306
        %v2609 = vunpack.c.h.b16 %v2306
        %v2610 = vunpack.c.l.b16 %v2307
        %v2611 = vunpack.c.h.b16 %v2307
        %v2612 = vunpack.c.l.b16 %v2308
        %v2613 = vunpack.c.h.b16 %v2308
        %v2614 = vunpack.c.l.b16 %v2309
        %v2615 = vunpack.c.h.b16 %v2309
        %v2616 = vunpack.c.l.b16 %v2310
        %v2617 = vunpack.c.h.b16 %v2310
        %v2618 = vunpack.c.l.b16 %v2311
        %v2619 = vunpack.c.h.b16 %v2311
        %v2620 = vunpack.c.l.b16 %v2312
        %v2621 = vunpack.c.h.b16 %v2312
        %v2622 = vunpack.c.l.b16 %v2313
        %v2623 = vunpack.c.h.b16 %v2313
        %v2624 = vunpack.c.l.b16 %v2314
        %v2625 = vunpack.c.h.b16 %v2314
        %v2626 = vunpack.c.l.b16 %v2315
        %v2627 = vunpack.c.h.b16 %v2315
        %v2628 = vunpack.c.l.b16 %v2316
        %v2629 = vunpack.c.h.b16 %v2316
        %v2630 = vunpack.c.l.b16 %v2317
        %v2631 = vunpack.c.h.b16 %v2317
        %v2632 = vunpack.c.l.b16 %v2318
        %v2633 = vunpack.c.h.b16 %v2318
        %v2634 = vunpack.c.l.b16 %v2319
        %v2635 = vunpack.c.h.b16 %v2319
        %v2636 = vunpack.c.l.b16 %v2320
        %v2637 = vunpack.c.h.b16 %v2320
        %v2638 = vunpack.c.l.b16 %v2321
        %v2639 = vunpack.c.h.b16 %v2321
        %v2640 = vunpack.c.l.b16 %v2322
        %v2641 = vunpack.c.h.b16 %v2322
        %v2642 = vunpack.c.l.b16 %v2323
        %v2643 = vunpack.c.h.b16 %v2323
        %v2644 = vunpack.c.l.b16 %v2324
        %v2645 = vunpack.c.h.b16 %v2324
        %v2646 = vunpack.c.l.b16 %v2325
        %v2647 = vunpack.c.h.b16 %v2325
        %v2648 = vunpack.c.l.b16 %v2326
        %v2649 = vunpack.c.h.b16 %v2326
        %v2650 = vunpack.c.l.b16 %v2327
        %v2651 = vunpack.c.h.b16 %v2327
        %v2652 = vunpack.c.l.b16 %v2328
        %v2653 = vunpack.c.h.b16 %v2328
        %v2654 = vunpack.c.l.b16 %v2329
        %v2655 = vunpack.c.h.b16 %v2329
        %v2656 = vunpack.c.l.b16 %v2330
        %v2657 = vunpack.c.h.b16 %v2330
        %v2658 = vunpack.c.l.b16 %v2331
        %v2659 = vunpack.c.h.b16 %v2331
        %v2660 = vunpack.c.l.b16 %v2332
        %v2661 = vunpack.c.h.b16 %v2332
        %v2662 = vunpack.c.l.b16 %v2333
        %v2663 = vunpack.c.h.b16 %v2333
        %v2664 = vunpack.c.l.b16 %v2334
        %v2665 = vunpack.c.h.b16 %v2334
        %v2666 = vunpack.c.l.b16 %v2335
        %v2667 = vunpack.c.h.b16 %v2335
        %v2668 = vunpack.c.l.b16 %v2336
        %v2669 = vunpack.c.h.b16 %v2336
        %v2670 = vunpack.c.l.b16 %v2337
        %v2671 = vunpack.c.h.b16 %v2337
        %v2672 = vunpack.c.l.b16 %v2338
        %v2673 = vunpack.c.h.b16 %v2338
        %v2674 = vunpack.c.l.b16 %v2339
        %v2675 = vunpack.c.h.b16 %v2339
        %v2676 = vunpack.c.l.b16 %v2340
        %v2677 = vunpack.c.h.b16 %v2340
        %v2678 = vunpack.c.l.b16 %v2341
        %v2679 = vunpack.c.h.b16 %v2341
        %v2680 = vunpack.c.l.b16 %v2342
        %v2681 = vunpack.c.h.b16 %v2342
        %v2682 = vunpack.c.l.b16 %v2343
        %v2683 = vunpack.c.h.b16 %v2343
        %v2684 = vunpack.c.l.b16 %v2344
        %v2685 = vunpack.c.h.b16 %v2344
        %v2686 = vunpack.c.l.b16 %v2345
        %v2687 = vunpack.c.h.b16 %v2345
        %v2688 = vunpack.c.l.b16 %v2346
        %v2689 = vunpack.c.h.b16 %v2346
        %v2690 = vunpack.c.l.b16 %v2347
        %v2691 = vunpack.c.h.b16 %v2347
        %v2692 = vunpack.c.l.b16 %v2348
        %v2693 = vunpack.c.h.b16 %v2348
        %v2694 = vunpack.c.l.b16 %v2349
        %v2695 = vunpack.c.h.b16 %v2349
        %v2696 = vunpack.c.l.b16 %v2350
        %v2697 = vunpack.c.h.b16 %v2350
        %v2698 = vunpack.c.l.b16 %v2351
        %v2699 = vunpack.c.h.b16 %v2351
        %v2700 = vunpack.c.l.b16 %v2352
        %v2701 = vunpack.c.h.b16 %v2352
        %v2702 = vunpack.c.l.b16 %v2353
        %v2703 = vunpack.c.h.b16 %v2353
        %v2704 = vunpack.c.l.b16 %v2354
        %v2705 = vunpack.c.h.b16 %v2354
        %v2706 = vunpack.c.l.b16 %v2355
        %v2707 = vunpack.c.h.b16 %v2355
        %v2708 = vunpack.c.l.b16 %v2356
        %v2709 = vunpack.c.h.b16 %v2356
        %v2710 = vunpack.c.l.b16 %v2357
        %v2711 = vunpack.c.h.b16 %v2357
        %v2712 = vunpack.c.l.b16 %v2358
        %v2713 = vunpack.c.h.b16 %v2358
        %v2714 = vunpack.c.l.b16 %v2359
        %v2715 = vunpack.c.h.b16 %v2359
        %v2716 = vunpack.c.l.b16 %v2360
        %v2717 = vunpack.c.h.b16 %v2360
        %v2718 = vunpack.c.l.b16 %v2361
        %v2719 = vunpack.c.h.b16 %v2361
        %v2720 = vunpack.c.l.b16 %v2362
        %v2721 = vunpack.c.h.b16 %v2362
        %v2722 = vunpack.c.l.b16 %v2363
        %v2723 = vunpack.c.h.b16 %v2363
        %v2724 = vunpack.c.l.b16 %v2364
        %v2725 = vunpack.c.h.b16 %v2364
        %v2726 = vunpack.c.l.b16 %v2365
        %v2727 = vunpack.c.h.b16 %v2365
        %v2728 = vunpack.c.l.b16 %v2366
        %v2729 = vunpack.c.h.b16 %v2366
        %v2730 = vunpack.c.l.b16 %v2367
        %v2731 = vunpack.c.h.b16 %v2367
        %v2732 = vunpack.c.l.b16 %v2368
        %v2733 = vunpack.c.h.b16 %v2368
        %v2734 = vunpack.c.l.b16 %v2369
        %v2735 = vunpack.c.h.b16 %v2369
        %v2736 = vunpack.c.l.b16 %v2370
        %v2737 = vunpack.c.h.b16 %v2370
        %v2738 = vunpack.c.l.b16 %v2371
        %v2739 = vunpack.c.h.b16 %v2371
        %v2740 = vunpack.c.l.b16 %v2372
        %v2741 = vunpack.c.h.b16 %v2372
        %v2742 = vunpack.c.l.b16 %v2373
        %v2743 = vunpack.c.h.b16 %v2373
        %v2744 = vunpack.c.l.b16 %v2374
        %v2745 = vunpack.c.h.b16 %v2374
        %v2746 = vunpack.c.l.b16 %v2375
        %v2747 = vunpack.c.h.b16 %v2375
        %v2748 = vunpack.c.l.b16 %v2376
        %v2749 = vunpack.c.h.b16 %v2376
        %v2750 = vunpack.c.l.b16 %v2377
        %v2751 = vunpack.c.h.b16 %v2377
        %v2752 = vunpack.c.l.b16 %v2378
        %v2753 = vunpack.c.h.b16 %v2378
        %v2754 = vunpack.c.l.b16 %v2379
        %v2755 = vunpack.c.h.b16 %v2379
        %v2756 = vunpack.c.l.b16 %v2380
        %v2757 = vunpack.c.h.b16 %v2380
        %v2758 = vunpack.c.l.b16 %v2381
        %v2759 = vunpack.c.h.b16 %v2381
        %v2760 = vunpack.c.l.b16 %v2382
        %v2761 = vunpack.c.h.b16 %v2382
        %v2762 = vunpack.c.l.b16 %v2383
        %v2763 = vunpack.c.h.b16 %v2383
        %v2764 = vunpack.c.l.b16 %v2384
        %v2765 = vunpack.c.h.b16 %v2384
        %v2766 = vunpack.c.l.b16 %v2385
        %v2767 = vunpack.c.h.b16 %v2385
        %v2768 = vunpack.c.l.b16 %v2386
        %v2769 = vunpack.c.h.b16 %v2386
        %v2770 = vunpack.c.l.b16 %v2387
        %v2771 = vunpack.c.h.b16 %v2387
        %v2772 = vunpack.c.l.b16 %v2388
        %v2773 = vunpack.c.h.b16 %v2388
        %v2774 = vunpack.c.l.b16 %v2389
        %v2775 = vunpack.c.h.b16 %v2389
        %v2776 = vunpack.c.l.b16 %v2390
        %v2777 = vunpack.c.h.b16 %v2390
        %v2778 = vunpack.c.l.b16 %v2391
        %v2779 = vunpack.c.h.b16 %v2391
        %v2780 = vunpack.c.l.b16 %v2392
        %v2781 = vunpack.c.h.b16 %v2392
        %v2782 = vunpack.c.l.b16 %v2393
        %v2783 = vunpack.c.h.b16 %v2393
        %v2784 = vunpack.c.l.b16 %v2394
        %v2785 = vunpack.c.h.b16 %v2394
        %v2786 = vunpack.c.l.b16 %v2395
        %v2787 = vunpack.c.h.b16 %v2395
        %v2788 = vunpack.c.l.b16 %v2396
        %v2789 = vunpack.c.h.b16 %v2396
        %v2790 = vunpack.c.l.b16 %v2397
        %v2791 = vunpack.c.h.b16 %v2397
        %v2792 = vunpack.c.l.b16 %v2398
        %v2793 = vunpack.c.h.b16 %v2398
        %v2794 = vunpack.c.l.b16 %v2399
        %v2795 = vunpack.c.h.b16 %v2399
        %v2796 = vunpack.c.l.b16 %v2400
        %v2797 = vunpack.c.h.b16 %v2400
        %v2798 = vunpack.c.l.b16 %v2401
        %v2799 = vunpack.c.h.b16 %v2401
        %v2800 = vunpack.c.l.b16 %v2402
        %v2801 = vunpack.c.h.b16 %v2402
        %v2802 = vunpack.c.l.b16 %v2403
        %v2803 = vunpack.c.h.b16 %v2403
        %v2804 = vunpack.c.l.b16 %v2404
        %v2805 = vunpack.c.h.b16 %v2404
        %v2806 = vunpack.c.l.b16 %v2405
        %v2807 = vunpack.c.h.b16 %v2405
        %v2808 = vunpack.c.l.b16 %v2406
        %v2809 = vunpack.c.h.b16 %v2406
        %v2810 = vunpack.c.l.b16 %v2407
        %v2811 = vunpack.c.h.b16 %v2407
        %v2812 = vunpack.c.l.b16 %v2408
        %v2813 = vunpack.c.h.b16 %v2408
        %v2814 = vunpack.c.l.b16 %v2409
        %v2815 = vunpack.c.h.b16 %v2409
        %v2816 = vpack.c.b16 %v2564, %v2560
        %v2817 = vpack.c.b16 %v2565, %v2561
        %v2818 = vpack.c.b16 %v2566, %v2562
        %v2819 = vpack.c.b16 %v2567, %v2563
        %v2820 = vpack.c.b16 %v2572, %v2568
        %v2821 = vpack.c.b16 %v2573, %v2569
        %v2822 = vpack.c.b16 %v2574, %v2570
        %v2823 = vpack.c.b16 %v2575, %v2571
        %v2824 = vpack.c.b16 %v2580, %v2576
        %v2825 = vpack.c.b16 %v2581, %v2577
        %v2826 = vpack.c.b16 %v2582, %v2578
        %v2827 = vpack.c.b16 %v2583, %v2579
        %v2828 = vpack.c.b16 %v2588, %v2584
        %v2829 = vpack.c.b16 %v2589, %v2585
        %v2830 = vpack.c.b16 %v2590, %v2586
        %v2831 = vpack.c.b16 %v2591, %v2587
        %v2832 = vpack.c.b16 %v2596, %v2592
        %v2833 = vpack.c.b16 %v2597, %v2593
        %v2834 = vpack.c.b16 %v2598, %v2594
        %v2835 = vpack.c.b16 %v2599, %v2595
        %v2836 = vpack.c.b16 %v2604, %v2600
        %v2837 = vpack.c.b16 %v2605, %v2601
        %v2838 = vpack.c.b16 %v2606, %v2602
        %v2839 = vpack.c.b16 %v2607, %v2603
        %v2840 = vpack.c.b16 %v2612, %v2608
        %v2841 = vpack.c.b16 %v2613, %v2609
        %v2842 = vpack.c.b16 %v2614, %v2610
        %v2843 = vpack.c.b16 %v2615, %v2611
        %v2844 = vpack.c.b16 %v2620, %v2616
        %v2845 = vpack.c.b16 %v2621, %v2617
        %v2846 = vpack.c.b16 %v2622, %v2618
        %v2847 = vpack.c.b16 %v2623, %v2619
        %v2848 = vpack.c.b16 %v2628, %v2624
        %v2849 = vpack.c.b16 %v2629, %v2625
        %v2850 = vpack.c.b16 %v2630, %v2626
        %v2851 = vpack.c.b16 %v2631, %v2627
        %v2852 = vpack.c.b16 %v2636, %v2632
        %v2853 = vpack.c.b16 %v2637, %v2633
        %v2854 = vpack.c.b16 %v2638, %v2634
        %v2855 = vpack.c.b16 %v2639, %v2635
        %v2856 = vpack.c.b16 %v2644, %v2640
        %v2857 = vpack.c.b16 %v2645, %v2641
        %v2858 = vpack.c.b16 %v2646, %v2642
        %v2859 = vpack.c.b16 %v2647, %v2643
        %v2860 = vpack.c.b16 %v2652, %v2648
        %v2861 = vpack.c.b16 %v2653, %v2649
        %v2862 = vpack.c.b16 %v2654, %v2650
        %v2863 = vpack.c.b16 %v2655, %v2651
        %v2864 = vpack.c.b16 %v2660, %v2656
        %v2865 = vpack.c.b16 %v2661, %v2657
        %v2866 = vpack.c.b16 %v2662, %v2658
        %v2867 = vpack.c.b16 %v2663, %v2659
        %v2868 = vpack.c.b16 %v2668, %v2664
        %v2869 = vpack.c.b16 %v2669, %v2665
        %v2870 = vpack.c.b16 %v2670, %v2666
        %v2871 = vpack.c.b16 %v2671, %v2667
        %v2872 = vpack.c.b16 %v2676, %v2672
        %v2873 = vpack.c.b16 %v2677, %v2673
        %v2874 = vpack.c.b16 %v2678, %v2674
        %v2875 = vpack.c.b16 %v2679, %v2675
        %v2876 = vpack.c.b16 %v2684, %v2680
        %v2877 = vpack.c.b16 %v2685, %v2681
        %v2878 = vpack.c.b16 %v2686, %v2682
        %v2879 = vpack.c.b16 %v2687, %v2683
        %v2880 = vpack.c.b16 %v2692, %v2688
        %v2881 = vpack.c.b16 %v2693, %v2689
        %v2882 = vpack.c.b16 %v2694, %v2690
        %v2883 = vpack.c.b16 %v2695, %v2691
        %v2884 = vpack.c.b16 %v2700, %v2696
        %v2885 = vpack.c.b16 %v2701, %v2697
        %v2886 = vpack.c.b16 %v2702, %v2698
        %v2887 = vpack.c.b16 %v2703, %v2699
        %v2888 = vpack.c.b16 %v2708, %v2704
        %v2889 = vpack.c.b16 %v2709, %v2705
        %v2890 = vpack.c.b16 %v2710, %v2706
        %v2891 = vpack.c.b16 %v2711, %v2707
        %v2892 = vpack.c.b16 %v2716, %v2712
        %v2893 = vpack.c.b16 %v2717, %v2713
        %v2894 = vpack.c.b16 %v2718, %v2714
        %v2895 = vpack.c.b16 %v2719, %v2715
        %v2896 = vpack.c.b16 %v2724, %v2720
        %v2897 = vpack.c.b16 %v2725, %v2721
        %v2898 = vpack.c.b16 %v2726, %v2722
        %v2899 = vpack.c.b16 %v2727, %v2723
        %v2900 = vpack.c.b16 %v2732, %v2728
        %v2901 = vpack.c.b16 %v2733, %v2729
        %v2902 = vpack.c.b16 %v2734, %v2730
        %v2903 = vpack.c.b16 %v2735, %v2731
        %v2904 = vpack.c.b16 %v2740, %v2736
        %v2905 = vpack.c.b16 %v2741, %v2737
        %v2906 = vpack.c.b16 %v2742, %v2738
        %v2907 = vpack.c.b16 %v2743, %v2739
        %v2908 = vpack.c.b16 %v2748, %v2744
        %v2909 = vpack.c.b16 %v2749, %v2745
        %v2910 = vpack.c.b16 %v2750, %v2746
        %v2911 = vpack.c.b16 %v2751, %v2747
        %v2912 = vpack.c.b16 %v2756, %v2752
        %v2913 = vpack.c.b16 %v2757, %v2753
        %v2914 = vpack.c.b16 %v2758, %v2754
        %v2915 = vpack.c.b16 %v2759, %v2755
        %v2916 = vpack.c.b16 %v2764, %v2760
        %v2917 = vpack.c.b16 %v2765, %v2761
        %v2918 = vpack.c.b16 %v2766, %v2762
        %v2919 = vpack.c.b16 %v2767, %v2763
        %v2920 = vpack.c.b16 %v2772, %v2768
        %v2921 = vpack.c.b16 %v2773, %v2769
        %v2922 = vpack.c.b16 %v2774, %v2770
        %v2923 = vpack.c.b16 %v2775, %v2771
        %v2924 = vpack.c.b16 %v2780, %v2776
        %v2925 = vpack.c.b16 %v2781, %v2777
        %v2926 = vpack.c.b16 %v2782, %v2778
        %v2927 = vpack.c.b16 %v2783, %v2779
        %v2928 = vpack.c.b16 %v2788, %v2784
        %v2929 = vpack.c.b16 %v2789, %v2785
        %v2930 = vpack.c.b16 %v2790, %v2786
        %v2931 = vpack.c.b16 %v2791, %v2787
        %v2932 = vpack.c.b16 %v2796, %v2792
        %v2933 = vpack.c.b16 %v2797, %v2793
        %v2934 = vpack.c.b16 %v2798, %v2794
        %v2935 = vpack.c.b16 %v2799, %v2795
        %v2936 = vpack.c.b16 %v2804, %v2800
        %v2937 = vpack.c.b16 %v2805, %v2801
        %v2938 = vpack.c.b16 %v2806, %v2802
        %v2939 = vpack.c.b16 %v2807, %v2803
        %v2940 = vpack.c.b16 %v2812, %v2808
        %v2941 = vpack.c.b16 %v2813, %v2809
        %v2942 = vpack.c.b16 %v2814, %v2810
        %v2943 = vpack.c.b16 %v2815, %v2811
        %3072 = vmatprep.subr.bf16.mxu0 %v2845
        %3073 = vmatpush1.bf16.msra.mxu0 %v2844
        %3074 = vmatprep.subr.bf16.mxu0 %v2841
        %3075 = vmatpush1.bf16.msra.mxu0 %v2840
        %3076 = vmatprep.subr.bf16.mxu0 %v2837
        %3077 = vmatpush1.bf16.msra.mxu0 %v2836
        %3078 = vmatprep.subr.bf16.mxu0 %v2833
        %3079 = vmatpush1.bf16.msra.mxu0 %v2832
        %3080 = vmatprep.subr.bf16.mxu0 %v2829
        %3081 = vmatpush1.bf16.msra.mxu0 %v2828
        %3082 = vmatprep.subr.bf16.mxu0 %v2825
        %3083 = vmatpush1.bf16.msra.mxu0 %v2824
        %3084 = vmatprep.subr.bf16.mxu0 %v2821
        %3085 = vmatpush1.bf16.msra.mxu0 %v2820
        %3086 = vmatprep.subr.bf16.mxu0 %v2817
        %3087 = vmatpush1.bf16.msra.mxu0 %v2816
        %3088 = vmatprep.subr.bf16.mxu0 %v2877
        %3089 = vmatpush2.bf16.msra.mxu0 %v2876
        %3090 = vmatprep.subr.bf16.mxu0 %v2873
        %3091 = vmatpush2.bf16.msra.mxu0 %v2872
        %3092 = vmatprep.subr.bf16.mxu0 %v2869
        %3093 = vmatpush2.bf16.msra.mxu0 %v2868
        %3094 = vmatprep.subr.bf16.mxu0 %v2865
        %3095 = vmatpush2.bf16.msra.mxu0 %v2864
        %3096 = vmatprep.subr.bf16.mxu0 %v2861
        %3097 = vmatpush2.bf16.msra.mxu0 %v2860
        %3098 = vmatprep.subr.bf16.mxu0 %v2857
        %3099 = vmatpush2.bf16.msra.mxu0 %v2856
        %3100 = vmatprep.subr.bf16.mxu0 %v2853
        %3101 = vmatpush2.bf16.msra.mxu0 %v2852
        %3102 = vmatprep.subr.bf16.mxu0 %v2849
        %3103 = vmatpush2.bf16.msra.mxu0 %v2848
        %3104 = vmatprep.mubr.bf16.mxu0 %v2279
        %3105 = vmatmul.mubr.bf16.gmra.mxu0 %v2278
        %v3106 = vpop.f32.mrf.mxu0
        %v3107 = vadd.f32 %v2415, %v3106
        %v3108 = vpop.f32.mrf.mxu0
        %v3109 = vadd.f32 %v2419, %v3108
        %v3110 = vpop.f32.mrf.mxu0
        %v3111 = vpop.f32.mrf.mxu0
        %3112 = vdwg.mxu0
        %3113 = vmatprep.subr.bf16.mxu0 %v2909
        %3114 = vmatpush1.bf16.msra.mxu0 %v2908
        %3115 = vmatprep.subr.bf16.mxu0 %v2905
        %3116 = vmatpush1.bf16.msra.mxu0 %v2904
        %3117 = vmatprep.subr.bf16.mxu0 %v2901
        %3118 = vmatpush1.bf16.msra.mxu0 %v2900
        %3119 = vmatprep.subr.bf16.mxu0 %v2897
        %3120 = vmatpush1.bf16.msra.mxu0 %v2896
        %3121 = vmatprep.subr.bf16.mxu0 %v2893
        %3122 = vmatpush1.bf16.msra.mxu0 %v2892
        %3123 = vmatprep.subr.bf16.mxu0 %v2889
        %3124 = vmatpush1.bf16.msra.mxu0 %v2888
        %3125 = vmatprep.subr.bf16.mxu0 %v2885
        %3126 = vmatpush1.bf16.msra.mxu0 %v2884
        %3127 = vmatprep.subr.bf16.mxu0 %v2881
        %3128 = vmatpush1.bf16.msra.mxu0 %v2880
        %3129 = vmatprep.subr.bf16.mxu0 %v2941
        %3130 = vmatpush2.bf16.msra.mxu0 %v2940
        %3131 = vmatprep.subr.bf16.mxu0 %v2937
        %3132 = vmatpush2.bf16.msra.mxu0 %v2936
        %3133 = vmatprep.subr.bf16.mxu0 %v2933
        %3134 = vmatpush2.bf16.msra.mxu0 %v2932
        %3135 = vmatprep.subr.bf16.mxu0 %v2929
        %3136 = vmatpush2.bf16.msra.mxu0 %v2928
        %3137 = vmatprep.subr.bf16.mxu0 %v2925
        %3138 = vmatpush2.bf16.msra.mxu0 %v2924
        %3139 = vmatprep.subr.bf16.mxu0 %v2921
        %3140 = vmatpush2.bf16.msra.mxu0 %v2920
        %3141 = vmatprep.subr.bf16.mxu0 %v2917
        %3142 = vmatpush2.bf16.msra.mxu0 %v2916
        %3143 = vmatprep.subr.bf16.mxu0 %v2913
        %3144 = vmatpush2.bf16.msra.mxu0 %v2912
        %3145 = vmatprep.mubr.bf16.mxu0 %v2281
        %3146 = vmatmul.mubr.bf16.gmra.mxu0 %v2280
        %v3147 = vpop.f32.mrf.mxu0
        %v3148 = vadd.f32 %v3107, %v3147
        %v3149 = vpop.f32.mrf.mxu0
        %v3150 = vadd.f32 %v3109, %v3149
        %v3151 = vpop.f32.mrf.mxu0
        %v3152 = vpop.f32.mrf.mxu0
        %3153 = vdwg.mxu0
        %3154 = vmatprep.subr.bf16.mxu0 %v2847
        %3155 = vmatpush1.bf16.msra.mxu0 %v2846
        %3156 = vmatprep.subr.bf16.mxu0 %v2843
        %3157 = vmatpush1.bf16.msra.mxu0 %v2842
        %3158 = vmatprep.subr.bf16.mxu0 %v2839
        %3159 = vmatpush1.bf16.msra.mxu0 %v2838
        %3160 = vmatprep.subr.bf16.mxu0 %v2835
        %3161 = vmatpush1.bf16.msra.mxu0 %v2834
        %3162 = vmatprep.subr.bf16.mxu0 %v2831
        %3163 = vmatpush1.bf16.msra.mxu0 %v2830
        %3164 = vmatprep.subr.bf16.mxu0 %v2827
        %3165 = vmatpush1.bf16.msra.mxu0 %v2826
        %3166 = vmatprep.subr.bf16.mxu0 %v2823
        %3167 = vmatpush1.bf16.msra.mxu0 %v2822
        %3168 = vmatprep.subr.bf16.mxu0 %v2819
        %3169 = vmatpush1.bf16.msra.mxu0 %v2818
        %3170 = vmatprep.subr.bf16.mxu0 %v2879
        %3171 = vmatpush2.bf16.msra.mxu0 %v2878
        %3172 = vmatprep.subr.bf16.mxu0 %v2875
        %3173 = vmatpush2.bf16.msra.mxu0 %v2874
        %3174 = vmatprep.subr.bf16.mxu0 %v2871
        %3175 = vmatpush2.bf16.msra.mxu0 %v2870
        %3176 = vmatprep.subr.bf16.mxu0 %v2867
        %3177 = vmatpush2.bf16.msra.mxu0 %v2866
        %3178 = vmatprep.subr.bf16.mxu0 %v2863
        %3179 = vmatpush2.bf16.msra.mxu0 %v2862
        %3180 = vmatprep.subr.bf16.mxu0 %v2859
        %3181 = vmatpush2.bf16.msra.mxu0 %v2858
        %3182 = vmatprep.subr.bf16.mxu0 %v2855
        %3183 = vmatpush2.bf16.msra.mxu0 %v2854
        %3184 = vmatprep.subr.bf16.mxu0 %v2851
        %3185 = vmatpush2.bf16.msra.mxu0 %v2850
        %3186 = vmatprep.mubr.bf16.mxu0 %v2279
        %3187 = vmatmul.mubr.bf16.gmra.mxu0 %v2278
        %v3188 = vpop.f32.mrf.mxu0
        %v3189 = vadd.f32 %v2423, %v3188
        %v3190 = vpop.f32.mrf.mxu0
        %v3191 = vadd.f32 %v2427, %v3190
        %v3192 = vpop.f32.mrf.mxu0
        %v3193 = vpop.f32.mrf.mxu0
        %3194 = vdwg.mxu0
        %3195 = vmatprep.subr.bf16.mxu0 %v2911
        %3196 = vmatpush1.bf16.msra.mxu0 %v2910
        %3197 = vmatprep.subr.bf16.mxu0 %v2907
        %3198 = vmatpush1.bf16.msra.mxu0 %v2906
        %3199 = vmatprep.subr.bf16.mxu0 %v2903
        %3200 = vmatpush1.bf16.msra.mxu0 %v2902
        %3201 = vmatprep.subr.bf16.mxu0 %v2899
        %3202 = vmatpush1.bf16.msra.mxu0 %v2898
        %3203 = vmatprep.subr.bf16.mxu0 %v2895
        %3204 = vmatpush1.bf16.msra.mxu0 %v2894
        %3205 = vmatprep.subr.bf16.mxu0 %v2891
        %3206 = vmatpush1.bf16.msra.mxu0 %v2890
        %3207 = vmatprep.subr.bf16.mxu0 %v2887
        %3208 = vmatpush1.bf16.msra.mxu0 %v2886
        %3209 = vmatprep.subr.bf16.mxu0 %v2883
        %3210 = vmatpush1.bf16.msra.mxu0 %v2882
        %3211 = vmatprep.subr.bf16.mxu0 %v2943
        %3212 = vmatpush2.bf16.msra.mxu0 %v2942
        %3213 = vmatprep.subr.bf16.mxu0 %v2939
        %3214 = vmatpush2.bf16.msra.mxu0 %v2938
        %3215 = vmatprep.subr.bf16.mxu0 %v2935
        %3216 = vmatpush2.bf16.msra.mxu0 %v2934
        %3217 = vmatprep.subr.bf16.mxu0 %v2931
        %3218 = vmatpush2.bf16.msra.mxu0 %v2930
        %3219 = vmatprep.subr.bf16.mxu0 %v2927
        %3220 = vmatpush2.bf16.msra.mxu0 %v2926
        %3221 = vmatprep.subr.bf16.mxu0 %v2923
        %3222 = vmatpush2.bf16.msra.mxu0 %v2922
        %3223 = vmatprep.subr.bf16.mxu0 %v2919
        %3224 = vmatpush2.bf16.msra.mxu0 %v2918
        %3225 = vmatprep.subr.bf16.mxu0 %v2915
        %3226 = vmatpush2.bf16.msra.mxu0 %v2914
        %3227 = vmatprep.mubr.bf16.mxu0 %v2281
        %3228 = vmatmul.mubr.bf16.gmra.mxu0 %v2280
        %v3229 = vpop.f32.mrf.mxu0
        %v3230 = vadd.f32 %v3189, %v3229
        %v3231 = vpop.f32.mrf.mxu0
        %v3232 = vadd.f32 %v3191, %v3231
        %v3233 = vpop.f32.mrf.mxu0
        %v3234 = vpop.f32.mrf.mxu0
        %3235 = vdwg.mxu0
        %v3236 = vsub.f32 0.0, %v3148
        %v3237 = vsub.f32 0.0, %v3150
        %v3238 = vsub.f32 0.0, %v3230
        %v3239 = vsub.f32 0.0, %v3232
        %v3240 = vmul.f32 %v3236, 1.442695
        %v3241 = vpow.pop %v3240
        %v3242 = vmul.f32 %v3237, 1.442695
        %v3243 = vpow.pop %v3242
        %v3244 = vmul.f32 %v3238, 1.442695
        %v3245 = vpow.pop %v3244
        %v3246 = vmul.f32 %v3239, 1.442695
        %v3247 = vpow.pop %v3246
        %v3248 = vadd.f32 %v3241, 1.0
        %v3249 = vadd.f32 %v3243, 1.0
        %v3250 = vadd.f32 %v3245, 1.0
        %v3251 = vadd.f32 %v3247, 1.0
        %v3252 = vrcp.pop %v3248
        %v3253 = vmul.f32 1.0, %v3252
        %v3254 = vrcp.pop %v3249
        %v3255 = vmul.f32 1.0, %v3254
        %v3256 = vrcp.pop %v3250
        %v3257 = vmul.f32 1.0, %v3256
        %v3258 = vrcp.pop %v3251
        %v3259 = vmul.f32 1.0, %v3258
        %v3260 = vpack.c.bf16 %v3253, %v3253
        %v3261 = vpack.c.bf16 %v3255, %v3255
        %v3262 = vpack.c.bf16 %v3257, %v3257
        %v3263 = vpack.c.bf16 %v3259, %v3259
        %v3264 = vld [vmem:[#allocation10] sm:$0xf]
        %v3265 = vld [vmem:[#allocation10 + $0x4] sm:$0xf]
        %v3266 = vld [vmem:[#allocation10 + $0x8] sm:$0xf]
        %v3267 = vld [vmem:[#allocation10 + $0xc] sm:$0xf]
        %v3268 = vld [vmem:[#allocation10 + $0x10] sm:$0xf]
        %v3269 = vld [vmem:[#allocation10 + $0x14] sm:$0xf]
        %v3270 = vld [vmem:[#allocation10 + $0x18] sm:$0xf]
        %v3271 = vld [vmem:[#allocation10 + $0x1c] sm:$0xf]
        %v3272 = vld [vmem:[#allocation10 + $0x20] sm:$0xf]
        %v3273 = vld [vmem:[#allocation10 + $0x24] sm:$0xf]
        %v3274 = vld [vmem:[#allocation10 + $0x28] sm:$0xf]
        %v3275 = vld [vmem:[#allocation10 + $0x2c] sm:$0xf]
        %v3276 = vld [vmem:[#allocation10 + $0x30] sm:$0xf]
        %v3277 = vld [vmem:[#allocation10 + $0x34] sm:$0xf]
        %v3278 = vld [vmem:[#allocation10 + $0x38] sm:$0xf]
        %v3279 = vld [vmem:[#allocation10 + $0x3c] sm:$0xf]
        %v3280 = vld [vmem:[#allocation10 + $0x40] sm:$0xf]
        %v3281 = vld [vmem:[#allocation10 + $0x44] sm:$0xf]
        %v3282 = vld [vmem:[#allocation10 + $0x48] sm:$0xf]
        %v3283 = vld [vmem:[#allocation10 + $0x4c] sm:$0xf]
        %v3284 = vld [vmem:[#allocation10 + $0x50] sm:$0xf]
        %v3285 = vld [vmem:[#allocation10 + $0x54] sm:$0xf]
        %v3286 = vld [vmem:[#allocation10 + $0x58] sm:$0xf]
        %v3287 = vld [vmem:[#allocation10 + $0x5c] sm:$0xf]
        %v3288 = vld [vmem:[#allocation10 + $0x60] sm:$0xf]
        %v3289 = vld [vmem:[#allocation10 + $0x64] sm:$0xf]
        %v3290 = vld [vmem:[#allocation10 + $0x68] sm:$0xf]
        %v3291 = vld [vmem:[#allocation10 + $0x6c] sm:$0xf]
        %v3292 = vld [vmem:[#allocation10 + $0x70] sm:$0xf]
        %v3293 = vld [vmem:[#allocation10 + $0x74] sm:$0xf]
        %v3294 = vld [vmem:[#allocation10 + $0x78] sm:$0xf]
        %v3295 = vld [vmem:[#allocation10 + $0x7c] sm:$0xf]
        %v3296 = vld [vmem:[#allocation10 + $0x80] sm:$0xf]
        %v3297 = vld [vmem:[#allocation10 + $0x84] sm:$0xf]
        %v3298 = vld [vmem:[#allocation10 + $0x88] sm:$0xf]
        %v3299 = vld [vmem:[#allocation10 + $0x8c] sm:$0xf]
        %v3300 = vld [vmem:[#allocation10 + $0x90] sm:$0xf]
        %v3301 = vld [vmem:[#allocation10 + $0x94] sm:$0xf]
        %v3302 = vld [vmem:[#allocation10 + $0x98] sm:$0xf]
        %v3303 = vld [vmem:[#allocation10 + $0x9c] sm:$0xf]
        %v3304 = vld [vmem:[#allocation10 + $0xa0] sm:$0xf]
        %v3305 = vld [vmem:[#allocation10 + $0xa4] sm:$0xf]
        %v3306 = vld [vmem:[#allocation10 + $0xa8] sm:$0xf]
        %v3307 = vld [vmem:[#allocation10 + $0xac] sm:$0xf]
        %v3308 = vld [vmem:[#allocation10 + $0xb0] sm:$0xf]
        %v3309 = vld [vmem:[#allocation10 + $0xb4] sm:$0xf]
        %v3310 = vld [vmem:[#allocation10 + $0xb8] sm:$0xf]
        %v3311 = vld [vmem:[#allocation10 + $0xbc] sm:$0xf]
        %v3312 = vld [vmem:[#allocation10 + $0xc0] sm:$0xf]
        %v3313 = vld [vmem:[#allocation10 + $0xc4] sm:$0xf]
        %v3314 = vld [vmem:[#allocation10 + $0xc8] sm:$0xf]
        %v3315 = vld [vmem:[#allocation10 + $0xcc] sm:$0xf]
        %v3316 = vld [vmem:[#allocation10 + $0xd0] sm:$0xf]
        %v3317 = vld [vmem:[#allocation10 + $0xd4] sm:$0xf]
        %v3318 = vld [vmem:[#allocation10 + $0xd8] sm:$0xf]
        %v3319 = vld [vmem:[#allocation10 + $0xdc] sm:$0xf]
        %v3320 = vld [vmem:[#allocation10 + $0xe0] sm:$0xf]
        %v3321 = vld [vmem:[#allocation10 + $0xe4] sm:$0xf]
        %v3322 = vld [vmem:[#allocation10 + $0xe8] sm:$0xf]
        %v3323 = vld [vmem:[#allocation10 + $0xec] sm:$0xf]
        %v3324 = vld [vmem:[#allocation10 + $0xf0] sm:$0xf]
        %v3325 = vld [vmem:[#allocation10 + $0xf4] sm:$0xf]
        %v3326 = vld [vmem:[#allocation10 + $0xf8] sm:$0xf]
        %v3327 = vld [vmem:[#allocation10 + $0xfc] sm:$0xf]
        %v3328 = vld [vmem:[%s6] sm:$0x1]
        %v3330 = vlaneseq
        %v3331 = vshrl.u32 %v3330, 7
        %v3332 = vsub.s32 0, %v3331
        %v3333 = vrot.slane %v3328, %v3332
        %v3399 = vunpack.c.l.b16 %v3264
        %v3400 = vunpack.c.l.b16 %v3265
        %v3401 = vunpack.c.l.b16 %v3266
        %v3402 = vunpack.c.l.b16 %v3267
        %v3403 = vunpack.c.l.b16 %v3268
        %v3404 = vunpack.c.l.b16 %v3269
        %v3405 = vunpack.c.l.b16 %v3270
        %v3406 = vunpack.c.l.b16 %v3271
        %v3407 = vunpack.c.l.b16 %v3272
        %v3408 = vunpack.c.l.b16 %v3273
        %v3409 = vunpack.c.l.b16 %v3274
        %v3410 = vunpack.c.l.b16 %v3275
        %v3411 = vunpack.c.l.b16 %v3276
        %v3412 = vunpack.c.l.b16 %v3277
        %v3413 = vunpack.c.l.b16 %v3278
        %v3414 = vunpack.c.l.b16 %v3279
        %v3415 = vunpack.c.l.b16 %v3280
        %v3416 = vunpack.c.l.b16 %v3281
        %v3417 = vunpack.c.l.b16 %v3282
        %v3418 = vunpack.c.l.b16 %v3283
        %v3419 = vunpack.c.l.b16 %v3284
        %v3420 = vunpack.c.l.b16 %v3285
        %v3421 = vunpack.c.l.b16 %v3286
        %v3422 = vunpack.c.l.b16 %v3287
        %v3423 = vunpack.c.l.b16 %v3288
        %v3424 = vunpack.c.l.b16 %v3289
        %v3425 = vunpack.c.l.b16 %v3290
        %v3426 = vunpack.c.l.b16 %v3291
        %v3427 = vunpack.c.l.b16 %v3292
        %v3428 = vunpack.c.l.b16 %v3293
        %v3429 = vunpack.c.l.b16 %v3294
        %v3430 = vunpack.c.l.b16 %v3295
        %v3431 = vunpack.c.l.b16 %v3296
        %v3432 = vunpack.c.l.b16 %v3297
        %v3433 = vunpack.c.l.b16 %v3298
        %v3434 = vunpack.c.l.b16 %v3299
        %v3435 = vunpack.c.l.b16 %v3300
        %v3436 = vunpack.c.l.b16 %v3301
        %v3437 = vunpack.c.l.b16 %v3302
        %v3438 = vunpack.c.l.b16 %v3303
        %v3439 = vunpack.c.l.b16 %v3304
        %v3440 = vunpack.c.l.b16 %v3305
        %v3441 = vunpack.c.l.b16 %v3306
        %v3442 = vunpack.c.l.b16 %v3307
        %v3443 = vunpack.c.l.b16 %v3308
        %v3444 = vunpack.c.l.b16 %v3309
        %v3445 = vunpack.c.l.b16 %v3310
        %v3446 = vunpack.c.l.b16 %v3311
        %v3447 = vunpack.c.l.b16 %v3312
        %v3448 = vunpack.c.l.b16 %v3313
        %v3449 = vunpack.c.l.b16 %v3314
        %v3450 = vunpack.c.l.b16 %v3315
        %v3451 = vunpack.c.l.b16 %v3316
        %v3452 = vunpack.c.l.b16 %v3317
        %v3453 = vunpack.c.l.b16 %v3318
        %v3454 = vunpack.c.l.b16 %v3319
        %v3455 = vunpack.c.l.b16 %v3320
        %v3456 = vunpack.c.l.b16 %v3321
        %v3457 = vunpack.c.l.b16 %v3322
        %v3458 = vunpack.c.l.b16 %v3323
        %v3459 = vunpack.c.l.b16 %v3324
        %v3460 = vunpack.c.l.b16 %v3325
        %v3461 = vunpack.c.l.b16 %v3326
        %v3462 = vunpack.c.l.b16 %v3327
        %v3463 = vpack.c.b16 %v3400, %v3399
        %v3464 = vpack.c.b16 %v3402, %v3401
        %v3465 = vpack.c.b16 %v3404, %v3403
        %v3466 = vpack.c.b16 %v3406, %v3405
        %v3467 = vpack.c.b16 %v3408, %v3407
        %v3468 = vpack.c.b16 %v3410, %v3409
        %v3469 = vpack.c.b16 %v3412, %v3411
        %v3470 = vpack.c.b16 %v3414, %v3413
        %v3471 = vpack.c.b16 %v3416, %v3415
        %v3472 = vpack.c.b16 %v3418, %v3417
        %v3473 = vpack.c.b16 %v3420, %v3419
        %v3474 = vpack.c.b16 %v3422, %v3421
        %v3475 = vpack.c.b16 %v3424, %v3423
        %v3476 = vpack.c.b16 %v3426, %v3425
        %v3477 = vpack.c.b16 %v3428, %v3427
        %v3478 = vpack.c.b16 %v3430, %v3429
        %v3479 = vpack.c.b16 %v3432, %v3431
        %v3480 = vpack.c.b16 %v3434, %v3433
        %v3481 = vpack.c.b16 %v3436, %v3435
        %v3482 = vpack.c.b16 %v3438, %v3437
        %v3483 = vpack.c.b16 %v3440, %v3439
        %v3484 = vpack.c.b16 %v3442, %v3441
        %v3485 = vpack.c.b16 %v3444, %v3443
        %v3486 = vpack.c.b16 %v3446, %v3445
        %v3487 = vpack.c.b16 %v3448, %v3447
        %v3488 = vpack.c.b16 %v3450, %v3449
        %v3489 = vpack.c.b16 %v3452, %v3451
        %v3490 = vpack.c.b16 %v3454, %v3453
        %v3491 = vpack.c.b16 %v3456, %v3455
        %v3492 = vpack.c.b16 %v3458, %v3457
        %v3493 = vpack.c.b16 %v3460, %v3459
        %v3494 = vpack.c.b16 %v3462, %v3461
        %3527 = vmatprep.subr.bf16.mxu0 0
        %3528 = vmatpush1.bf16.msra.mxu0 %v3470
        %3529 = vmatprep.subr.bf16.mxu0 0
        %3530 = vmatpush1.bf16.msra.mxu0 %v3469
        %3531 = vmatprep.subr.bf16.mxu0 0
        %3532 = vmatpush1.bf16.msra.mxu0 %v3468
        %3533 = vmatprep.subr.bf16.mxu0 0
        %3534 = vmatpush1.bf16.msra.mxu0 %v3467
        %3535 = vmatprep.subr.bf16.mxu0 0
        %3536 = vmatpush1.bf16.msra.mxu0 %v3466
        %3537 = vmatprep.subr.bf16.mxu0 0
        %3538 = vmatpush1.bf16.msra.mxu0 %v3465
        %3539 = vmatprep.subr.bf16.mxu0 0
        %3540 = vmatpush1.bf16.msra.mxu0 %v3464
        %3541 = vmatprep.subr.bf16.mxu0 0
        %3542 = vmatpush1.bf16.msra.mxu0 %v3463
        %3543 = vmatprep.subr.bf16.mxu0 0
        %3544 = vmatpush2.bf16.msra.mxu0 %v3478
        %3545 = vmatprep.subr.bf16.mxu0 0
        %3546 = vmatpush2.bf16.msra.mxu0 %v3477
        %3547 = vmatprep.subr.bf16.mxu0 0
        %3548 = vmatpush2.bf16.msra.mxu0 %v3476
        %3549 = vmatprep.subr.bf16.mxu0 0
        %3550 = vmatpush2.bf16.msra.mxu0 %v3475
        %3551 = vmatprep.subr.bf16.mxu0 0
        %3552 = vmatpush2.bf16.msra.mxu0 %v3474
        %3553 = vmatprep.subr.bf16.mxu0 0
        %3554 = vmatpush2.bf16.msra.mxu0 %v3473
        %3555 = vmatprep.subr.bf16.mxu0 0
        %3556 = vmatpush2.bf16.msra.mxu0 %v3472
        %3557 = vmatprep.subr.bf16.mxu0 0
        %3558 = vmatpush2.bf16.msra.mxu0 %v3471
        %3559 = vmatprep.mubr.bf16.mxu0 %v3261
        %3560 = vmatmul.mubr.bf16.gmra.mxu0 %v3260
        %v3561 = vpop.f32.mrf.mxu0
        %v3562 = vadd.f32 %v3333, %v3561
        %v3563 = vpop.f32.mrf.mxu0
        %v3564 = vpop.f32.mrf.mxu0
        %v3565 = vpop.f32.mrf.mxu0
        %3566 = vdwg.mxu0
        %3567 = vmatprep.subr.bf16.mxu0 0
        %3568 = vmatpush1.bf16.msra.mxu0 %v3486
        %3569 = vmatprep.subr.bf16.mxu0 0
        %3570 = vmatpush1.bf16.msra.mxu0 %v3485
        %3571 = vmatprep.subr.bf16.mxu0 0
        %3572 = vmatpush1.bf16.msra.mxu0 %v3484
        %3573 = vmatprep.subr.bf16.mxu0 0
        %3574 = vmatpush1.bf16.msra.mxu0 %v3483
        %3575 = vmatprep.subr.bf16.mxu0 0
        %3576 = vmatpush1.bf16.msra.mxu0 %v3482
        %3577 = vmatprep.subr.bf16.mxu0 0
        %3578 = vmatpush1.bf16.msra.mxu0 %v3481
        %3579 = vmatprep.subr.bf16.mxu0 0
        %3580 = vmatpush1.bf16.msra.mxu0 %v3480
        %3581 = vmatprep.subr.bf16.mxu0 0
        %3582 = vmatpush1.bf16.msra.mxu0 %v3479
        %3583 = vmatprep.subr.bf16.mxu0 0
        %3584 = vmatpush2.bf16.msra.mxu0 %v3494
        %3585 = vmatprep.subr.bf16.mxu0 0
        %3586 = vmatpush2.bf16.msra.mxu0 %v3493
        %3587 = vmatprep.subr.bf16.mxu0 0
        %3588 = vmatpush2.bf16.msra.mxu0 %v3492
        %3589 = vmatprep.subr.bf16.mxu0 0
        %3590 = vmatpush2.bf16.msra.mxu0 %v3491
        %3591 = vmatprep.subr.bf16.mxu0 0
        %3592 = vmatpush2.bf16.msra.mxu0 %v3490
        %3593 = vmatprep.subr.bf16.mxu0 0
        %3594 = vmatpush2.bf16.msra.mxu0 %v3489
        %3595 = vmatprep.subr.bf16.mxu0 0
        %3596 = vmatpush2.bf16.msra.mxu0 %v3488
        %3597 = vmatprep.subr.bf16.mxu0 0
        %3598 = vmatpush2.bf16.msra.mxu0 %v3487
        %3599 = vmatprep.mubr.bf16.mxu0 %v3263
        %3600 = vmatmul.mubr.bf16.gmra.mxu0 %v3262
        %v3601 = vpop.f32.mrf.mxu0
        %v3602 = vadd.f32 %v3562, %v3601
        %v3603 = vpop.f32.mrf.mxu0
        %v3604 = vpop.f32.mrf.mxu0
        %v3605 = vpop.f32.mrf.mxu0
        %3606 = vdwg.mxu0
        %3607 = vmax.xlane.f32.xlu0 %v3602
        %v3608 = vpop.xlane.xlu0 %3607
        %v3609 = vsub.f32 %v3602, %v3608
        %v3610 = vmul.f32 %v3609, 1.442695
        %v3611 = vpow.pop %v3610
        %3612 = vadd.xlane.f32.xlu0 %v3611
        %v3613 = vpop.xlane.xlu0 %3612
        %v3614 = vrcp.pop %v3613
        %v3615 = vmul.f32 %v3611, %v3614
        %3616 = vst [vmem:[%s350] sm:$0xff] %v3615
        %s3617 = sand.u32 %s186, 1
        %s3618 = scalar_lea.sflag [#allocation4], %s3617
        %s3619 = sand.u32 %s186, 1
        %s3620 = smul.addr %s3619, 8
        %s3621 = scalar_lea.vmem [#allocation11], %s3620
        // Predicated region
        $region69: #{tpu_custom_call.1} parent=47 // pred_check
          %p3622 = pneg %p196
        $region70: #{tpu_custom_call.1} parent=47 // pred_check_branch
          %3624 = sbr.rel (%p3622) target = $region72
        $region71: #{tpu_custom_call.1} parent=47 // pred_region
          %s3626 = ssub.s32 128, 128
          %3627 = vsyncadd %s3618, %s3626
          %s3628 = smul.addr %s26, 128
          %s3629 = scalar_lea.hbm %s7, %s3628
          %s3631 = sshll.u32 %s3621, 4
          %s3632 = int_to_ptr.vmem [resolvable:$true] %s3631
          %3634 = dma.vmem_to_hbm [thread:$0]  %s3632, 128, %s3629, %s3618
        $region72: #{tpu_custom_call.1} parent=47 // pred_fallthru
          _
      $region48: #{tpu_custom_call.1} parent=5 // pred_fallthru
        _
      %p3635 = scmp.le.s32.totalorder 2, %s21
      // Predicated region
      $region73: #{tpu_custom_call.1} parent=5 // pred_check
        %p3636 = pneg %p3635
      $region74: #{tpu_custom_call.1} parent=5 // pred_check_branch
        %3638 = sbr.rel (%p3636) target = $region76
      $region75: #{tpu_custom_call.1} parent=5 // pred_region
        %s3639 = ssub.s32 %s21, 2
        // Predicated region
        $region77: #{tpu_custom_call.1} parent=75 // pred_check
          %p3640 = pneg %p202
        $region78: #{tpu_custom_call.1} parent=75 // pred_check_branch
          %3642 = sbr.rel (%p3640) target = $region80
        $region79: #{tpu_custom_call.1} parent=75 // pred_region
          %s3643 = sand.u32 %s187, 1
          %s3644 = scalar_lea.sflag [#allocation4], %s3643
          %s3645 = sand.u32 %s187, 1
          %s3646 = smul.addr %s3645, 8
          %s3647 = scalar_lea.vmem [#allocation11], %s3646
          %3648 = dma.done %s3644, 128
        $region80: #{tpu_custom_call.1} parent=75 // pred_fallthru
          _
      $region76: #{tpu_custom_call.1} parent=5 // pred_fallthru
        _
    $region6: #{tpu_custom_call.1} parent=1 // loop_footer
      %s25 = sadd.s32 1, %s21
    $region7: #{tpu_custom_call.1} parent=1 // loop_footer_branch
      %20 = sbr.rel target = $region3
    $region8: #{tpu_custom_call.1} parent=1 // loop_exit
      _
    %3649 = vsyncpa [#allocation3], 1
    %s3650 = scalar_lea.sflag [#allocation3], 1
    %3651 = vsyncpa %s3650, 1
    %3652 = vsyncpa [#allocation6], 1
    %3653 = vsyncpa [#allocation9], 1
    %3654 = vsyncpa [#allocation4], 1
    %s3655 = scalar_lea.sflag [#allocation4], 1
    %3656 = vsyncpa %s3655, 1

</llo_original>
